<compile_context>
chip_gen: v6e
topology: v6e:2x2x1
jax: 0.10.0
libtpu: 0.0.40
codegen_flags: <defaults>
</compile_context>

<pallas_src>
import functools

import numpy as np
import jax
import jax.numpy as jnp
from jax.experimental import pallas as pl
from jax.experimental.pallas import tpu as pltpu

_BN_EPS = 1e-5
_LANE = 128
_TM_MAX = 256        # max M tile (rows of im2col patches)
_TARGET_NM = 2       # aim for >=2 grid steps so megacore (v7x) has work per core
_K_SINGLE_MAX = 2048 # largest K handled without a K grid axis (VMEM-safe at bf16)
_GELU_C = 0.7978845608028654  # sqrt(2/pi)


def _round_up(x, m):
    return (x + m - 1) // m * m


# --------------------------- in-kernel elementwise ----------------------------

def _gelu_tanh(x):
    # tanh-form GELU: one EUP push per element (review: cheaper than erf poly).
    return 0.5 * x * (1.0 + jnp.tanh(_GELU_C * (x + 0.044715 * x * x * x)))


def _quant_act(x, bits):
    # TODO(synk): activation_quantize_fn2 source not provided; DoReFa activation
    # quantizer assumed (clamp to [0,1], uniform 2^bits-1 levels, round-half-even).
    n = float(2 ** bits - 1)
    return jnp.round(jnp.clip(x, 0.0, 1.0) * n) / n


# ----------------------------- fused block kernel ------------------------------

def _fused_block_kernel(*refs, act2, abits, has_pool):
    """One (tm, Kp) tile of shared im2col patches:
         h = gelu(p @ W1 + b1)                 (all branch conv1 + folded BN1 + GELU)
         y = act(h @ W2 + b2)                  (all branch 1x1 conv2 + folded BN2 + act)
         y += p @ W_pool                       (ZeroPad+AvgPool branch, disjoint lanes)
       Single-K path: no K grid axis, no VMEM accumulator (K fits one tile here)."""
    if has_pool:
        x_ref, w1_ref, b1_ref, w2_ref, b2_ref, wp_ref, o_ref = refs
    else:
        x_ref, w1_ref, b1_ref, w2_ref, b2_ref, o_ref = refs

    p = x_ref[...]
    h = jnp.dot(p, w1_ref[...], preferred_element_type=jnp.float32) + b1_ref[...]
    h = _gelu_tanh(h)
    y = jnp.dot(h.astype(jnp.bfloat16), w2_ref[...],
                preferred_element_type=jnp.float32) + b2_ref[...]
    if act2 == "gelu":
        y = _gelu_tanh(y)
    else:
        y = _quant_act(y, abits)
    if has_pool:
        # pool lanes of W2/b2 are zero and quant(0)=0, so this add is an exact concat
        y = y + jnp.dot(p, wp_ref[...], preferred_element_type=jnp.float32)
    o_ref[...] = y.astype(o_ref.dtype)


def _fused_block_call(patches, sp, *, act2, abits, has_pool, out_dtype):
    M, K = patches.shape
    Kp = sp["Kp"]
    MIDp = sp["b1"].shape[1]
    COUTp = sp["b2"].shape[1]
    assert K == sp["K"]
    assert Kp <= _K_SINGLE_MAX, "add a K grid axis for this channel count"

    # tm: multiple of 16 (bf16 sublane packing), sized so the grid has >=2 steps.
    tm = min(_TM_MAX, max(16, _round_up(pl.cdiv(M, _TARGET_NM), 16)))
    Mp = _round_up(M, tm)
    nm = Mp // tm
    patches = jnp.pad(patches, ((0, Mp - M), (0, Kp - K)))

    operands = [patches, sp["w1"], sp["b1"], sp["w2"], sp["b2"]]
    in_specs = [
        pl.BlockSpec((tm, Kp), lambda i: (i, 0)),        # shared im2col patches tile
        pl.BlockSpec((Kp, MIDp), lambda i: (0, 0)),      # W1 (branches lane-stacked)
        pl.BlockSpec((1, MIDp), lambda i: (0, 0)),       # b1
        pl.BlockSpec((MIDp, COUTp), lambda i: (0, 0)),   # W2 (branch block-diagonal)
        pl.BlockSpec((1, COUTp), lambda i: (0, 0)),      # b2
    ]
    if has_pool:
        operands.append(sp["wp"])
        in_specs.append(pl.BlockSpec((Kp, COUTp), lambda i: (0, 0)))  # AvgPool branch

    flops = 2 * Mp * Kp * MIDp + 2 * Mp * MIDp * COUTp
    if has_pool:
        flops += 2 * Mp * Kp * COUTp
    trans = Mp * MIDp + (Mp * COUTp if act2 == "gelu" else 0)   # one tanh per gelu elem
    bytes_acc = (Mp * Kp * 2 + Kp * MIDp * 2 + MIDp * COUTp * 2 + 4 * (MIDp + COUTp)
                 + (Kp * COUTp * 2 if has_pool else 0)
                 + Mp * COUTp * jnp.dtype(out_dtype).itemsize)

    kern = functools.partial(_fused_block_kernel, act2=act2, abits=abits,
                             has_pool=has_pool)
    return pl.pallas_call(
        kern,
        out_shape=jax.ShapeDtypeStruct((Mp, COUTp), out_dtype),
        grid_spec=pltpu.PrefetchScalarGridSpec(
            num_scalar_prefetch=0,
            grid=(nm,),
            in_specs=in_specs,
            out_specs=pl.BlockSpec((tm, COUTp), lambda i: (i, 0)),
        ),
        compiler_params=pltpu.CompilerParams(
            dimension_semantics=("parallel",),
            vmem_limit_bytes=32 * 1024 * 1024,
        ),
        cost_estimate=pl.CostEstimate(flops=flops, transcendentals=trans,
                                      bytes_accessed=bytes_acc),
    )(*operands)


# ------------------------------ parameter prep ---------------------------------

def _fold_bn(rng, c):
    gamma = rng.uniform(0.8, 1.2, c).astype(np.float32)
    beta = rng.uniform(-0.1, 0.1, c).astype(np.float32)
    mean = (rng.standard_normal(c) * 0.05).astype(np.float32)
    var = rng.uniform(0.8, 1.2, c).astype(np.float32)
    scale = gamma / np.sqrt(var + _BN_EPS)
    bias = beta - mean * scale
    return scale, bias


def _dense_grouped_weight(w_oihw, cin, n_groups):
    """PyTorch grouped-conv weight (Cout, Cin/g, KH, KW) -> dense (KH*KW*Cin, Cout),
    tap-major / channel-minor row layout (matches the wrapper-side im2col)."""
    w = np.asarray(w_oihw, dtype=np.float32)
    cout, cin_g, kh, kw = w.shape
    assert cin_g * n_groups == cin
    cout_g = cout // n_groups
    out = np.zeros((kh * kw * cin, cout), dtype=np.float32)
    for ih in range(kh):
        for iw in range(kw):
            base = (ih * kw + iw) * cin
            for g in range(n_groups):
                out[base + g * cin_g: base + (g + 1) * cin_g,
                    g * cout_g:(g + 1) * cout_g] = \
                    w[g * cout_g:(g + 1) * cout_g, :, ih, iw].T
    return out


def _embed_7x7(dense, kb, off, cin, mid):
    """Embed a kb x kb branch weight (rows = taps x cin) into the shared 7x7 window
    at tap offset `off` (= 3 - branch_padding)."""
    full = np.zeros((49 * cin, mid), np.float32)
    for ih in range(kb):
        for iw in range(kb):
            src = (ih * kb + iw) * cin
            dst = ((ih + off) * 7 + (iw + off)) * cin
            full[dst:dst + cin, :] = dense[src:src + cin, :]
    return full


def _pad2(w, r, c):
    o = np.zeros((r, c), np.float32)
    o[:w.shape[0], :w.shape[1]] = w
    return o


def _pad_bias(b, c):
    o = np.zeros((1, c), np.float32)
    o[0, :b.shape[0]] = b
    return o


def _prep_branch(rng, cin, mid, kb, pb, n_groups):
    cin_g = cin // n_groups
    mid_g = mid // n_groups
    w1 = (rng.standard_normal((mid, cin_g, kb, kb)) /
          np.sqrt(cin_g * kb * kb)).astype(np.float32)
    w2 = (rng.standard_normal((cin, mid_g, 1, 1)) / np.sqrt(mid_g)).astype(np.float32)
    s1, b1 = _fold_bn(rng, mid)
    s2, b2 = _fold_bn(rng, cin)
    w1d = _dense_grouped_weight(w1, cin, n_groups) * s1[None, :]
    w1e = _embed_7x7(w1d, kb, 3 - pb, cin, mid)              # (49*cin, mid)
    w2d = _dense_grouped_weight(w2, mid, n_groups) * s2[None, :]  # (mid, cin)
    return w1e, b1, w2d, b2


def init_multihead_params(in_planes, out_planes, groups, stride, abit_inter=2, seed=0):
    assert stride == 2, "fused path implemented for the stride=2 configuration"
    assert all(g is not None for g in groups), "forward path requires all four branches"
    rng = np.random.default_rng(seed)
    g1, g2, g3, _ = groups
    cpt = 4
    cin = in_planes
    t = 8
    mid = t * cin
    K7 = 49 * cin

    # ---- stage 1: three conv branches + AvgPool branch, fused on one shared window
    branch_cfgs = [(7, 3, cin // g1), (4, 2, cin // g2), (2, 1, cin // g3)]
    w1_cols, b1_cat, b2_cat = [], [], []
    w2_all = np.zeros((3 * mid, cpt * cin), np.float32)
    for bi, (kb, pb, n_groups) in enumerate(branch_cfgs):
        w1e, b1, w2d, b2 = _prep_branch(rng, cin, mid, kb, pb, n_groups)
        w1_cols.append(w1e)
        b1_cat.append(b1)
        w2_all[bi * mid:(bi + 1) * mid, bi * cin:(bi + 1) * cin] = w2d
        b2_cat.append(b2)
    w1_all = np.concatenate(w1_cols, axis=1)                       # (K7, 3*mid)
    b1_all = np.concatenate(b1_cat)                                # (3*mid,)
    b2_all = np.concatenate(b2_cat + [np.zeros(cin, np.float32)])  # pool lanes bias 0

    # ZeroPad2d(1)+AvgPool2d(2) as a linear map of the shared 7x7 patches
    # (pool window == taps (2,2),(2,3),(3,2),(3,3) of the pad=3 window).
    w_pool = np.zeros((K7, cpt * cin), np.float32)
    for ih in (2, 3):
        for iw in (2, 3):
            base = (ih * 7 + iw) * cin
            for c in range(cin):
                w_pool[base + c, 3 * cin + c] = 0.25

    Kp = _round_up(K7, _LANE)
    MIDp = _round_up(3 * mid, _LANE)
    COUTp = _round_up(cpt * cin, _LANE)
    stage1 = dict(
        w1=jnp.asarray(_pad2(w1_all, Kp, MIDp), jnp.bfloat16),
        b1=jnp.asarray(_pad_bias(b1_all, MIDp)),
        w2=jnp.asarray(_pad2(w2_all, MIDp, COUTp), jnp.bfloat16),
        b2=jnp.asarray(_pad_bias(b2_all, COUTp)),
        wp=jnp.asarray(_pad2(w_pool, Kp, COUTp), jnp.bfloat16),
        K=K7, Kp=Kp, cout=cpt * cin,
    )

    # ---- final block (convf): k=2, pad=1, stride=1; channel shuffle folded into W1 rows
    cinf = cpt * cin
    groupvf = 8
    ngf = cinf // groupvf
    midf = t * cinf
    Kf = 4 * cinf
    cin_gf = cinf // ngf
    mid_gf = midf // ngf
    w1f = (rng.standard_normal((midf, cin_gf, 2, 2)) /
           np.sqrt(cin_gf * 4)).astype(np.float32)
    w2f = (rng.standard_normal((out_planes, mid_gf, 1, 1)) /
           np.sqrt(mid_gf)).astype(np.float32)
    s1f, b1f = _fold_bn(rng, midf)
    s2f, b2f = _fold_bn(rng, out_planes)
    w1fd = _dense_grouped_weight(w1f, cinf, ngf) * s1f[None, :]     # rows: shuffled chans
    # fold the view/transpose/view channel shuffle: branch-order channel c reads the
    # weight row of shuffled channel perm_inv(c) = (c % cin)*cpt + c//cin.
    perm_inv = np.array([(c % cin) * cpt + (c // cin) for c in range(cinf)])
    row_perm = np.concatenate([tap * cinf + perm_inv for tap in range(4)])
    w1fd = w1fd[row_perm, :]
    w2fd = _dense_grouped_weight(w2f, midf, ngf) * s2f[None, :]

    Kfp = _round_up(Kf, _LANE)
    MIDfp = _round_up(midf, _LANE)
    COUTfp = _round_up(out_planes, _LANE)
    stagef = dict(
        w1=jnp.asarray(_pad2(w1fd, Kfp, MIDfp), jnp.bfloat16),
        b1=jnp.asarray(_pad_bias(b1f, MIDfp)),
        w2=jnp.asarray(_pad2(w2fd, MIDfp, COUTfp), jnp.bfloat16),
        b2=jnp.asarray(_pad_bias(b2f, COUTfp)),
        K=Kf, Kp=Kfp, cout=out_planes,
    )

    return dict(stride=stride, abits=abit_inter, cpt=cpt, cin=cin,
                stage1=stage1, stagef=stagef)


# -------------------------------- module forward --------------------------------

def multihead_forward(x_nchw, params):
    cin = params["cin"]
    cpt = params["cpt"]
    x = jnp.transpose(x_nchw, (0, 2, 3, 1)).astype(jnp.float32)    # NHWC
    N, H, W, C = x.shape
    assert C == cin and H % 2 == 0 and W % 2 == 0, \
        "fused path covers the stride=2 / even-spatial configuration"
    OH, OW = H // 2, W // 2

    # ---- stage 1: ONE shared 7x7/stride-2 im2col (pad=3) feeds all branches + pool
    # TODO(synk): move this patch formation into the kernel (tap-shifted loads).
    xp = jnp.pad(x, ((0, 0), (3, 3), (3, 3), (0, 0))).astype(jnp.bfloat16)
    cols = [xp[:, ih:ih + 2 * OH:2, iw:iw + 2 * OW:2, :]
            for ih in range(7) for iw in range(7)]
    M1 = N * OH * OW
    p1 = jnp.concatenate(cols, axis=-1).reshape(M1, 49 * cin)

    s1 = params["stage1"]
    out1 = _fused_block_call(p1, s1, act2="quant", abits=params["abits"],
                             has_pool=True, out_dtype=jnp.bfloat16)
    branch = out1[:M1, :cpt * cin].reshape(N, OH, OW, cpt * cin)   # out1|out2|out3|pool

    # ---- stage 2 (convf): k=2, pad=1, stride=1; shuffle already folded into W1 rows
    xpf = jnp.pad(branch, ((0, 0), (1, 1), (1, 1), (0, 0)))
    OHf, OWf = OH + 1, OW + 1
    colsf = [xpf[:, ih:ih + OHf, iw:iw + OWf, :] for ih in range(2) for iw in range(2)]
    M2 = N * OHf * OWf
    p2 = jnp.concatenate(colsf, axis=-1).reshape(M2, 4 * cpt * cin)

    sf = params["stagef"]
    out2 = _fused_block_call(p2, sf, act2="gelu", abits=params["abits"],
                             has_pool=False, out_dtype=jnp.float32)
    y = out2[:M2, :sf["cout"]].reshape(N, OHf, OWf, sf["cout"])
    return jnp.transpose(y, (0, 3, 1, 2))                          # back to NCHW


# ------------------------------------- main --------------------------------------

if __name__ == "__main__":
    in_planes = 8
    out_planes = 16
    groups = (1, 2, 4, 1)   # all four branches active (cpt = 4)
    stride = 2              # stride-2 path with spatial 16 (valid config in the module)

    params = init_multihead_params(in_planes, out_planes, groups, stride,
                                   abit_inter=2, seed=0)

    key = jax.random.PRNGKey(0)
    x = jax.random.normal(key, (2, in_planes, 16, 16), dtype=jnp.float32)  # NCHW

    fwd = jax.jit(lambda xx: multihead_forward(xx, params))
    out = jax.block_until_ready(fwd(x))

    assert out.shape == (2, out_planes, 9, 9), out.shape
    assert bool(jnp.all(jnp.isfinite(out)))
    print("KERNEL_OK")
</pallas_src>

<mosaic_0001>
module attributes {stable_mosaic.version = 11 : i64} {
  func.func @_fused_block_kernel(%arg0: i32, %arg1: memref<64x512xbf16, #tpu.memory_space<vmem>>, %arg2: memref<512x256xbf16, #tpu.memory_space<vmem>>, %arg3: memref<1x256xf32, #tpu.memory_space<vmem>>, %arg4: memref<256x128xbf16, #tpu.memory_space<vmem>>, %arg5: memref<1x128xf32, #tpu.memory_space<vmem>>, %arg6: memref<512x128xbf16, #tpu.memory_space<vmem>>, %arg7: memref<64x128xbf16, #tpu.memory_space<vmem>>) attributes {dimension_semantics = [#tpu.dimension_semantics<parallel>], iteration_bounds = array<i64: 2>, scalar_prefetch = 0 : i64, scratch_operands = 0 : i64, tpu.core_type = #tpu.core_type<tc>, window_params = [{transform_indices = @transform_0, window_bounds = array<i64: 64, 512>}, {pipeline_mode = #tpu.pipeline_mode<synchronous>, transform_indices = @transform_1, window_bounds = array<i64: 512, 256>}, {pipeline_mode = #tpu.pipeline_mode<synchronous>, transform_indices = @transform_2, window_bounds = array<i64: 1, 256>}, {pipeline_mode = #tpu.pipeline_mode<synchronous>, transform_indices = @transform_3, window_bounds = array<i64: 256, 128>}, {pipeline_mode = #tpu.pipeline_mode<synchronous>, transform_indices = @transform_4, window_bounds = array<i64: 1, 128>}, {pipeline_mode = #tpu.pipeline_mode<synchronous>, transform_indices = @transform_5, window_bounds = array<i64: 512, 128>}, {transform_indices = @transform_6, window_bounds = array<i64: 64, 128>}]} {
    %c0 = arith.constant 0 : index
    %c0_0 = arith.constant 0 : index
    %0 = vector.load %arg1[%c0, %c0_0] : memref<64x512xbf16, #tpu.memory_space<vmem>>, vector<64x512xbf16>
    %c0_1 = arith.constant 0 : index
    %c0_2 = arith.constant 0 : index
    %1 = vector.load %arg2[%c0_1, %c0_2] : memref<512x256xbf16, #tpu.memory_space<vmem>>, vector<512x256xbf16>
    %cst = arith.constant dense<0.000000e+00> : vector<64x256xf32>
    %2 = tpu.matmul %0, %1, %cst {dimension_numbers = #tpu.dot_dimension_numbers<[1], [0], [0], [1], [0, 0, 1, 1], [], []>} : vector<64x512xbf16>, vector<512x256xbf16>, vector<64x256xf32> -> vector<64x256xf32>
    %c0_3 = arith.constant 0 : index
    %c0_4 = arith.constant 0 : index
    %3 = vector.load %arg3[%c0_3, %c0_4] : memref<1x256xf32, #tpu.memory_space<vmem>>, vector<1x256xf32>
    %4 = vector.broadcast %3 : vector<1x256xf32> to vector<64x256xf32>
    %5 = arith.addf %2, %4 : vector<64x256xf32>
    %cst_5 = arith.constant 5.000000e-01 : f32
    %6 = vector.broadcast %cst_5 : f32 to vector<64x256xf32>
    %7 = arith.mulf %6, %5 : vector<64x256xf32>
    %cst_6 = arith.constant 4.471500e-02 : f32
    %8 = vector.broadcast %cst_6 : f32 to vector<64x256xf32>
    %9 = arith.mulf %8, %5 : vector<64x256xf32>
    %10 = arith.mulf %9, %5 : vector<64x256xf32>
    %11 = arith.mulf %10, %5 : vector<64x256xf32>
    %12 = arith.addf %5, %11 : vector<64x256xf32>
    %cst_7 = arith.constant 0.797884583 : f32
    %13 = vector.broadcast %cst_7 : f32 to vector<64x256xf32>
    %14 = arith.mulf %13, %12 : vector<64x256xf32>
    %15 = math.tanh %14 : vector<64x256xf32>
    %cst_8 = arith.constant 1.000000e+00 : f32
    %16 = vector.broadcast %cst_8 : f32 to vector<64x256xf32>
    %17 = arith.addf %16, %15 : vector<64x256xf32>
    %18 = arith.mulf %7, %17 : vector<64x256xf32>
    %19 = arith.truncf %18 : vector<64x256xf32> to vector<64x256xbf16>
    %c0_9 = arith.constant 0 : index
    %c0_10 = arith.constant 0 : index
    %20 = vector.load %arg4[%c0_9, %c0_10] : memref<256x128xbf16, #tpu.memory_space<vmem>>, vector<256x128xbf16>
    %cst_11 = arith.constant dense<0.000000e+00> : vector<64x128xf32>
    %21 = tpu.matmul %19, %20, %cst_11 {dimension_numbers = #tpu.dot_dimension_numbers<[1], [0], [0], [1], [0, 0, 1, 1], [], []>} : vector<64x256xbf16>, vector<256x128xbf16>, vector<64x128xf32> -> vector<64x128xf32>
    %c0_12 = arith.constant 0 : index
    %c0_13 = arith.constant 0 : index
    %22 = vector.load %arg5[%c0_12, %c0_13] : memref<1x128xf32, #tpu.memory_space<vmem>>, vector<1x128xf32>
    %23 = vector.broadcast %22 : vector<1x128xf32> to vector<64x128xf32>
    %24 = arith.addf %21, %23 : vector<64x128xf32>
    %cst_14 = arith.constant 0.000000e+00 : f32
    %cst_15 = arith.constant 1.000000e+00 : f32
    %25 = vector.broadcast %cst_14 : f32 to vector<64x128xf32>
    %26 = arith.maximumf %25, %24 : vector<64x128xf32>
    %27 = vector.broadcast %cst_15 : f32 to vector<64x128xf32>
    %28 = arith.minimumf %27, %26 : vector<64x128xf32>
    %cst_16 = arith.constant 3.000000e+00 : f32
    %29 = vector.broadcast %cst_16 : f32 to vector<64x128xf32>
    %30 = arith.mulf %28, %29 : vector<64x128xf32>
    %31 = math.roundeven %30 : vector<64x128xf32>
    %cst_17 = arith.constant 3.000000e+00 : f32
    %32 = vector.broadcast %cst_17 : f32 to vector<64x128xf32>
    %33 = arith.divf %31, %32 : vector<64x128xf32>
    %c0_18 = arith.constant 0 : index
    %c0_19 = arith.constant 0 : index
    %34 = vector.load %arg6[%c0_18, %c0_19] : memref<512x128xbf16, #tpu.memory_space<vmem>>, vector<512x128xbf16>
    %cst_20 = arith.constant dense<0.000000e+00> : vector<64x128xf32>
    %35 = tpu.matmul %0, %34, %cst_20 {dimension_numbers = #tpu.dot_dimension_numbers<[1], [0], [0], [1], [0, 0, 1, 1], [], []>} : vector<64x512xbf16>, vector<512x128xbf16>, vector<64x128xf32> -> vector<64x128xf32>
    %36 = arith.addf %33, %35 : vector<64x128xf32>
    %37 = arith.truncf %36 : vector<64x128xf32> to vector<64x128xbf16>
    %c0_21 = arith.constant 0 : index
    %c0_22 = arith.constant 0 : index
    %38 = vector.load %arg7[%c0_21, %c0_22] : memref<64x128xbf16, #tpu.memory_space<vmem>>, vector<64x128xbf16>
    tpu.vector_store %arg7[%c0_21, %c0_22], %37 {strides = array<i32>} : memref<64x128xbf16, #tpu.memory_space<vmem>>, vector<64x128xbf16>,
    return
  }
  func.func @transform_0(%arg0: i32) -> (i32, i32) {
    %c0_i32 = arith.constant 0 : i32
    %c0_i32_0 = arith.constant 0 : i32
    return %arg0, %c0_i32 : i32, i32
  }
  func.func @transform_1(%arg0: i32) -> (i32, i32) {
    %c0_i32 = arith.constant 0 : i32
    %c0_i32_0 = arith.constant 0 : i32
    %c0_i32_1 = arith.constant 0 : i32
    return %c0_i32, %c0_i32_0 : i32, i32
  }
  func.func @transform_2(%arg0: i32) -> (i32, i32) {
    %c0_i32 = arith.constant 0 : i32
    %c0_i32_0 = arith.constant 0 : i32
    %c0_i32_1 = arith.constant 0 : i32
    return %c0_i32, %c0_i32_0 : i32, i32
  }
  func.func @transform_3(%arg0: i32) -> (i32, i32) {
    %c0_i32 = arith.constant 0 : i32
    %c0_i32_0 = arith.constant 0 : i32
    %c0_i32_1 = arith.constant 0 : i32
    return %c0_i32, %c0_i32_0 : i32, i32
  }
  func.func @transform_4(%arg0: i32) -> (i32, i32) {
    %c0_i32 = arith.constant 0 : i32
    %c0_i32_0 = arith.constant 0 : i32
    %c0_i32_1 = arith.constant 0 : i32
    return %c0_i32, %c0_i32_0 : i32, i32
  }
  func.func @transform_5(%arg0: i32) -> (i32, i32) {
    %c0_i32 = arith.constant 0 : i32
    %c0_i32_0 = arith.constant 0 : i32
    %c0_i32_1 = arith.constant 0 : i32
    return %c0_i32, %c0_i32_0 : i32, i32
  }
  func.func @transform_6(%arg0: i32) -> (i32, i32) {
    %c0_i32 = arith.constant 0 : i32
    %c0_i32_0 = arith.constant 0 : i32
    return %arg0, %c0_i32 : i32, i32
  }
}

module attributes {stable_mosaic.version = 11 : i64} {
  func.func @_fused_block_kernel(%arg0: i32, %arg1: memref<96x128xbf16, #tpu.memory_space<vmem>>, %arg2: memref<128x256xbf16, #tpu.memory_space<vmem>>, %arg3: memref<1x256xf32, #tpu.memory_space<vmem>>, %arg4: memref<256x128xbf16, #tpu.memory_space<vmem>>, %arg5: memref<1x128xf32, #tpu.memory_space<vmem>>, %arg6: memref<96x128xf32, #tpu.memory_space<vmem>>) attributes {dimension_semantics = [#tpu.dimension_semantics<parallel>], iteration_bounds = array<i64: 2>, scalar_prefetch = 0 : i64, scratch_operands = 0 : i64, tpu.core_type = #tpu.core_type<tc>, window_params = [{transform_indices = @transform_0, window_bounds = array<i64: 96, 128>}, {pipeline_mode = #tpu.pipeline_mode<synchronous>, transform_indices = @transform_1, window_bounds = array<i64: 128, 256>}, {pipeline_mode = #tpu.pipeline_mode<synchronous>, transform_indices = @transform_2, window_bounds = array<i64: 1, 256>}, {pipeline_mode = #tpu.pipeline_mode<synchronous>, transform_indices = @transform_3, window_bounds = array<i64: 256, 128>}, {pipeline_mode = #tpu.pipeline_mode<synchronous>, transform_indices = @transform_4, window_bounds = array<i64: 1, 128>}, {transform_indices = @transform_5, window_bounds = array<i64: 96, 128>}]} {
    %c0 = arith.constant 0 : index
    %c0_0 = arith.constant 0 : index
    %0 = vector.load %arg1[%c0, %c0_0] : memref<96x128xbf16, #tpu.memory_space<vmem>>, vector<96x128xbf16>
    %c0_1 = arith.constant 0 : index
    %c0_2 = arith.constant 0 : index
    %1 = vector.load %arg2[%c0_1, %c0_2] : memref<128x256xbf16, #tpu.memory_space<vmem>>, vector<128x256xbf16>
    %cst = arith.constant dense<0.000000e+00> : vector<96x256xf32>
    %2 = tpu.matmul %0, %1, %cst {dimension_numbers = #tpu.dot_dimension_numbers<[1], [0], [0], [1], [0, 0, 1, 1], [], []>} : vector<96x128xbf16>, vector<128x256xbf16>, vector<96x256xf32> -> vector<96x256xf32>
    %c0_3 = arith.constant 0 : index
    %c0_4 = arith.constant 0 : index
    %3 = vector.load %arg3[%c0_3, %c0_4] : memref<1x256xf32, #tpu.memory_space<vmem>>, vector<1x256xf32>
    %4 = vector.broadcast %3 : vector<1x256xf32> to vector<96x256xf32>
    %5 = arith.addf %2, %4 : vector<96x256xf32>
    %cst_5 = arith.constant 5.000000e-01 : f32
    %6 = vector.broadcast %cst_5 : f32 to vector<96x256xf32>
    %7 = arith.mulf %6, %5 : vector<96x256xf32>
    %cst_6 = arith.constant 4.471500e-02 : f32
    %8 = vector.broadcast %cst_6 : f32 to vector<96x256xf32>
    %9 = arith.mulf %8, %5 : vector<96x256xf32>
    %10 = arith.mulf %9, %5 : vector<96x256xf32>
    %11 = arith.mulf %10, %5 : vector<96x256xf32>
    %12 = arith.addf %5, %11 : vector<96x256xf32>
    %cst_7 = arith.constant 0.797884583 : f32
    %13 = vector.broadcast %cst_7 : f32 to vector<96x256xf32>
    %14 = arith.mulf %13, %12 : vector<96x256xf32>
    %15 = math.tanh %14 : vector<96x256xf32>
    %cst_8 = arith.constant 1.000000e+00 : f32
    %16 = vector.broadcast %cst_8 : f32 to vector<96x256xf32>
    %17 = arith.addf %16, %15 : vector<96x256xf32>
    %18 = arith.mulf %7, %17 : vector<96x256xf32>
    %19 = arith.truncf %18 : vector<96x256xf32> to vector<96x256xbf16>
    %c0_9 = arith.constant 0 : index
    %c0_10 = arith.constant 0 : index
    %20 = vector.load %arg4[%c0_9, %c0_10] : memref<256x128xbf16, #tpu.memory_space<vmem>>, vector<256x128xbf16>
    %cst_11 = arith.constant dense<0.000000e+00> : vector<96x128xf32>
    %21 = tpu.matmul %19, %20, %cst_11 {dimension_numbers = #tpu.dot_dimension_numbers<[1], [0], [0], [1], [0, 0, 1, 1], [], []>} : vector<96x256xbf16>, vector<256x128xbf16>, vector<96x128xf32> -> vector<96x128xf32>
    %c0_12 = arith.constant 0 : index
    %c0_13 = arith.constant 0 : index
    %22 = vector.load %arg5[%c0_12, %c0_13] : memref<1x128xf32, #tpu.memory_space<vmem>>, vector<1x128xf32>
    %23 = vector.broadcast %22 : vector<1x128xf32> to vector<96x128xf32>
    %24 = arith.addf %21, %23 : vector<96x128xf32>
    %cst_14 = arith.constant 5.000000e-01 : f32
    %25 = vector.broadcast %cst_14 : f32 to vector<96x128xf32>
    %26 = arith.mulf %25, %24 : vector<96x128xf32>
    %cst_15 = arith.constant 4.471500e-02 : f32
    %27 = vector.broadcast %cst_15 : f32 to vector<96x128xf32>
    %28 = arith.mulf %27, %24 : vector<96x128xf32>
    %29 = arith.mulf %28, %24 : vector<96x128xf32>
    %30 = arith.mulf %29, %24 : vector<96x128xf32>
    %31 = arith.addf %24, %30 : vector<96x128xf32>
    %cst_16 = arith.constant 0.797884583 : f32
    %32 = vector.broadcast %cst_16 : f32 to vector<96x128xf32>
    %33 = arith.mulf %32, %31 : vector<96x128xf32>
    %34 = math.tanh %33 : vector<96x128xf32>
    %cst_17 = arith.constant 1.000000e+00 : f32
    %35 = vector.broadcast %cst_17 : f32 to vector<96x128xf32>
    %36 = arith.addf %35, %34 : vector<96x128xf32>
    %37 = arith.mulf %26, %36 : vector<96x128xf32>
    %c0_18 = arith.constant 0 : index
    %c0_19 = arith.constant 0 : index
    %38 = vector.load %arg6[%c0_18, %c0_19] : memref<96x128xf32, #tpu.memory_space<vmem>>, vector<96x128xf32>
    tpu.vector_store %arg6[%c0_18, %c0_19], %37 {strides = array<i32>} : memref<96x128xf32, #tpu.memory_space<vmem>>, vector<96x128xf32>,
    return
  }
  func.func @transform_0(%arg0: i32) -> (i32, i32) {
    %c0_i32 = arith.constant 0 : i32
    %c0_i32_0 = arith.constant 0 : i32
    return %arg0, %c0_i32 : i32, i32
  }
  func.func @transform_1(%arg0: i32) -> (i32, i32) {
    %c0_i32 = arith.constant 0 : i32
    %c0_i32_0 = arith.constant 0 : i32
    %c0_i32_1 = arith.constant 0 : i32
    return %c0_i32, %c0_i32_0 : i32, i32
  }
  func.func @transform_2(%arg0: i32) -> (i32, i32) {
    %c0_i32 = arith.constant 0 : i32
    %c0_i32_0 = arith.constant 0 : i32
    %c0_i32_1 = arith.constant 0 : i32
    return %c0_i32, %c0_i32_0 : i32, i32
  }
  func.func @transform_3(%arg0: i32) -> (i32, i32) {
    %c0_i32 = arith.constant 0 : i32
    %c0_i32_0 = arith.constant 0 : i32
    %c0_i32_1 = arith.constant 0 : i32
    return %c0_i32, %c0_i32_0 : i32, i32
  }
  func.func @transform_4(%arg0: i32) -> (i32, i32) {
    %c0_i32 = arith.constant 0 : i32
    %c0_i32_0 = arith.constant 0 : i32
    %c0_i32_1 = arith.constant 0 : i32
    return %c0_i32, %c0_i32_0 : i32, i32
  }
  func.func @transform_5(%arg0: i32) -> (i32, i32) {
    %c0_i32 = arith.constant 0 : i32
    %c0_i32_0 = arith.constant 0 : i32
    return %arg0, %c0_i32 : i32, i32
  }
}

</mosaic_0001>

<llo_original>
// kernel: _lambda_.3
$region0: #{_lambda_.3}
  #allocation0 [shape = 'u32[]', space=smem, size = 0x4, offset = 0x4, fixed_abs, tag = 'smem constant byte address 0x4 - core index']
  #allocation1 [shape = 'u32[144,128]{1,0:T(1,128)}', space=vmem, size = 0x12000, scoped, tag = 'internal scratch']
  %s0 = inlined_call_operand.vmem [shape: bf16[192,128], index: 0, kind: input, shape index: {}]
  %s1 = inlined_call_operand.vmem [shape: bf16[128,256], index: 1, kind: input, shape index: {}]
  %s2 = inlined_call_operand.vmem [shape: f32[1,256], index: 2, kind: input, shape index: {}]
  %s3 = inlined_call_operand.vmem [shape: bf16[256,128], index: 3, kind: input, shape index: {}]
  %s4 = inlined_call_operand.vmem [shape: f32[1,128], index: 4, kind: input, shape index: {}]
  %s5 = inlined_call_operand.vmem [shape: f32[192,128], index: 5, kind: output, shape index: {}]
  %s6 = sld [smem:[#allocation0]]
  $region53: #{_lambda_.3} parent=0
    _
  %s8 = ssub.s32 1, %s6
  %s9 = scalar_select 0, %s8, %s6
  loop: start=0, step=1, limit=4
  $region2: #{_lambda_.3} parent=0 // loop_pre_header
    _
  $region3: #{_lambda_.3} parent=0 // loop_header
    %s11 = sphi 0, %s15
    %p12 = scmp.ge.s32.totalorder %s11, 4
    %s21 = sphi 0, %s23
    %s24 = sphi 0, %s21
    %s25 = sphi 0, %s24
    %s41 = sphi 0, %s25
    %s45 = sphi 0, %s45
    %s47 = sphi 0, %s45
    %s48 = sphi 0, %s47
    %s62 = sphi 0, %s48
    %s66 = sphi 0, %s66
    %s68 = sphi 0, %s66
    %s69 = sphi 0, %s68
    %s83 = sphi 0, %s69
    %s87 = sphi 0, %s87
    %s89 = sphi 0, %s87
    %s90 = sphi 0, %s89
    %s104 = sphi 0, %s90
    %s108 = sphi 0, %s108
    %s110 = sphi 0, %s108
    %s111 = sphi 0, %s110
    %s125 = sphi 0, %s111
    %s131 = sphi 0, %s133
    %s134 = sphi 0, %s131
    %s135 = sphi 0, %s134
    %s151 = sphi 0, %s135
  $region4: #{_lambda_.3} parent=0 // loop_header_branch
    %14 = sbr.rel (%p12) target = $region8
  $region5: #{_lambda_.3} parent=0 // loop_body
    %s16 = ssub.s32 %s11, 1
    %s17 = ssub.s32 %s11, 2
    %s18 = sadd.s32 %s11, 1
    %s19 = ssub.s32 %s11, %s18
    %p20 = scmp.eq.s32.totalorder %s19, 0
    %s22 = sadd.s32 %s21, 1
    %s23 = scalar_select %p20, %s21, %s22
    %p26 = pneg %p20
    %p27 = scmp.eq.s32.totalorder %s11, 1
    %p28 = por %p26, %p27
    %p29 = scmp.ne.s32.totalorder %s21, %s24
    %p30 = scmp.eq.s32.totalorder %s11, 0
    %p31 = por %p29, %p30
    %p32 = scmp.ne.s32.totalorder %s21, %s24
    %p33 = scmp.eq.s32.totalorder %s16, 1
    %p34 = por %p32, %p33
    %p35 = scmp.ne.s32.totalorder %s24, %s25
    %p36 = scmp.eq.s32.totalorder %s16, 0
    %p37 = por %p35, %p36
    %p38 = scmp.ne.s32.totalorder %s24, %s25
    %p39 = scmp.eq.s32.totalorder %s17, 1
    %p40 = por %p38, %p39
    %p42 = scmp.ne.s32.totalorder %s25, %s41
    %p43 = scmp.eq.s32.totalorder %s17, 0
    %p44 = por %p42, %p43
    %s46 = sadd.s32 %s45, 1
    %p49 = scmp.eq.s32.totalorder %s11, 1
    %p50 = scmp.ne.s32.totalorder %s45, %s47
    %p51 = scmp.eq.s32.totalorder %s11, 0
    %p52 = por %p50, %p51
    %p53 = scmp.ne.s32.totalorder %s45, %s47
    %p54 = scmp.eq.s32.totalorder %s16, 1
    %p55 = por %p53, %p54
    %p56 = scmp.ne.s32.totalorder %s47, %s48
    %p57 = scmp.eq.s32.totalorder %s16, 0
    %p58 = por %p56, %p57
    %p59 = scmp.ne.s32.totalorder %s47, %s48
    %p60 = scmp.eq.s32.totalorder %s17, 1
    %p61 = por %p59, %p60
    %p63 = scmp.ne.s32.totalorder %s48, %s62
    %p64 = scmp.eq.s32.totalorder %s17, 0
    %p65 = por %p63, %p64
    %s67 = sadd.s32 %s66, 1
    %p70 = scmp.eq.s32.totalorder %s11, 1
    %p71 = scmp.ne.s32.totalorder %s66, %s68
    %p72 = scmp.eq.s32.totalorder %s11, 0
    %p73 = por %p71, %p72
    %p74 = scmp.ne.s32.totalorder %s66, %s68
    %p75 = scmp.eq.s32.totalorder %s16, 1
    %p76 = por %p74, %p75
    %p77 = scmp.ne.s32.totalorder %s68, %s69
    %p78 = scmp.eq.s32.totalorder %s16, 0
    %p79 = por %p77, %p78
    %p80 = scmp.ne.s32.totalorder %s68, %s69
    %p81 = scmp.eq.s32.totalorder %s17, 1
    %p82 = por %p80, %p81
    %p84 = scmp.ne.s32.totalorder %s69, %s83
    %p85 = scmp.eq.s32.totalorder %s17, 0
    %p86 = por %p84, %p85
    %s88 = sadd.s32 %s87, 1
    %p91 = scmp.eq.s32.totalorder %s11, 1
    %p92 = scmp.ne.s32.totalorder %s87, %s89
    %p93 = scmp.eq.s32.totalorder %s11, 0
    %p94 = por %p92, %p93
    %p95 = scmp.ne.s32.totalorder %s87, %s89
    %p96 = scmp.eq.s32.totalorder %s16, 1
    %p97 = por %p95, %p96
    %p98 = scmp.ne.s32.totalorder %s89, %s90
    %p99 = scmp.eq.s32.totalorder %s16, 0
    %p100 = por %p98, %p99
    %p101 = scmp.ne.s32.totalorder %s89, %s90
    %p102 = scmp.eq.s32.totalorder %s17, 1
    %p103 = por %p101, %p102
    %p105 = scmp.ne.s32.totalorder %s90, %s104
    %p106 = scmp.eq.s32.totalorder %s17, 0
    %p107 = por %p105, %p106
    %s109 = sadd.s32 %s108, 1
    %p112 = scmp.eq.s32.totalorder %s11, 1
    %p113 = scmp.ne.s32.totalorder %s108, %s110
    %p114 = scmp.eq.s32.totalorder %s11, 0
    %p115 = por %p113, %p114
    %p116 = scmp.ne.s32.totalorder %s108, %s110
    %p117 = scmp.eq.s32.totalorder %s16, 1
    %p118 = por %p116, %p117
    %p119 = scmp.ne.s32.totalorder %s110, %s111
    %p120 = scmp.eq.s32.totalorder %s16, 0
    %p121 = por %p119, %p120
    %p122 = scmp.ne.s32.totalorder %s110, %s111
    %p123 = scmp.eq.s32.totalorder %s17, 1
    %p124 = por %p122, %p123
    %p126 = scmp.ne.s32.totalorder %s111, %s125
    %p127 = scmp.eq.s32.totalorder %s17, 0
    %p128 = por %p126, %p127
    %s129 = ssub.s32 %s11, %s18
    %p130 = scmp.eq.s32.totalorder %s129, 0
    %s132 = sadd.s32 %s131, 1
    %s133 = scalar_select %p130, %s131, %s132
    %p136 = pneg %p130
    %p137 = scmp.eq.s32.totalorder %s11, 1
    %p138 = por %p136, %p137
    %p139 = scmp.ne.s32.totalorder %s131, %s134
    %p140 = scmp.eq.s32.totalorder %s11, 0
    %p141 = por %p139, %p140
    %p142 = scmp.ne.s32.totalorder %s131, %s134
    %p143 = scmp.eq.s32.totalorder %s16, 1
    %p144 = por %p142, %p143
    %p145 = scmp.ne.s32.totalorder %s134, %s135
    %p146 = scmp.eq.s32.totalorder %s16, 0
    %p147 = por %p145, %p146
    %p148 = scmp.ne.s32.totalorder %s134, %s135
    %p149 = scmp.eq.s32.totalorder %s17, 1
    %p150 = por %p148, %p149
    %p152 = scmp.ne.s32.totalorder %s135, %s151
    %p153 = scmp.eq.s32.totalorder %s17, 0
    %p154 = por %p152, %p153
    %p155 = scmp.le.s32.totalorder 1, %s11
    %p156 = scmp.lt.s32.totalorder %s11, 3
    %p157 = pnand %p155, %p156
    %p158 = pneg %p157
    // Predicated region
    $region9: #{_lambda_.3} parent=5 // pred_check
      _
    $region10: #{_lambda_.3} parent=5 // pred_check_branch
      %160 = sbr.rel (%p157) target = $region12
    $region11: #{_lambda_.3} parent=5 // pred_region
      %s161 = ssub.s32 %s11, 1
      // Predicated region
      $region13: #{_lambda_.3} parent=11 // pred_check
        %p162 = pneg %p58
      $region14: #{_lambda_.3} parent=11 // pred_check_branch
        %164 = sbr.rel (%p162) target = $region16
      $region15: #{_lambda_.3} parent=11 // pred_region
        _
      $region16: #{_lambda_.3} parent=11 // pred_fallthru
        _
      // Predicated region
      $region17: #{_lambda_.3} parent=11 // pred_check
        %p165 = pneg %p79
      $region18: #{_lambda_.3} parent=11 // pred_check_branch
        %167 = sbr.rel (%p165) target = $region20
      $region19: #{_lambda_.3} parent=11 // pred_region
        _
      $region20: #{_lambda_.3} parent=11 // pred_fallthru
        _
      // Predicated region
      $region21: #{_lambda_.3} parent=11 // pred_check
        %p168 = pneg %p100
      $region22: #{_lambda_.3} parent=11 // pred_check_branch
        %170 = sbr.rel (%p168) target = $region24
      $region23: #{_lambda_.3} parent=11 // pred_region
        _
      $region24: #{_lambda_.3} parent=11 // pred_fallthru
        _
      // Predicated region
      $region25: #{_lambda_.3} parent=11 // pred_check
        %p171 = pneg %p121
      $region26: #{_lambda_.3} parent=11 // pred_check_branch
        %173 = sbr.rel (%p171) target = $region28
      $region27: #{_lambda_.3} parent=11 // pred_region
        _
      $region28: #{_lambda_.3} parent=11 // pred_fallthru
        _
    $region12: #{_lambda_.3} parent=5 // pred_fallthru
      _
    %p174 = scmp.lt.s32.totalorder %s11, 2
    // Predicated region
    $region29: #{_lambda_.3} parent=5 // pred_check
      %p175 = pneg %p174
    $region30: #{_lambda_.3} parent=5 // pred_check_branch
      %177 = sbr.rel (%p175) target = $region32
    $region31: #{_lambda_.3} parent=5 // pred_region
      // Predicated region
      $region33: #{_lambda_.3} parent=31 // pred_check
        %p178 = pneg %p31
      $region34: #{_lambda_.3} parent=31 // pred_check_branch
        %180 = sbr.rel (%p178) target = $region36
      $region35: #{_lambda_.3} parent=31 // pred_region
        %s181 = smul.u32 12, %s11
        %p182 = scmp.lt.s32.totalorder %s181, 23
        %s183 = scalar_select %p182, %s181, 23
        %s184 = smul.addr %s183, 4
        %s185 = scalar_lea.vmem %s0, %s184
        %s186 = smul.u32 12, %s11
      $region36: #{_lambda_.3} parent=31 // pred_fallthru
        _
    $region32: #{_lambda_.3} parent=5 // pred_fallthru
      _
    %p187 = scmp.le.s32.totalorder 1, %s11
    %p188 = scmp.lt.s32.totalorder %s11, 3
    %p189 = pnand %p187, %p188
    %p190 = pneg %p189
    // Predicated region
    $region37: #{_lambda_.3} parent=5 // pred_check
      _
    $region38: #{_lambda_.3} parent=5 // pred_check_branch
      %192 = sbr.rel (%p189) target = $region40
    $region39: #{_lambda_.3} parent=5 // pred_region
      %s193 = ssub.s32 %s11, 1
      %s194 = smul.u32 12, %s16
      %p195 = scmp.lt.s32.totalorder %s194, 23
      %s196 = scalar_select %p195, %s194, 23
      %s197 = smul.addr %s196, 4
      %s198 = scalar_lea.vmem %s0, %s197
      %p199 = pneg %p37
      %p200 = pneg %p34
      %p201 = pneg %p58
      %p202 = pneg %p55
      %p203 = pneg %p79
      %p204 = pneg %p76
      %p205 = pneg %p100
      %p206 = pneg %p97
      %p207 = pneg %p121
      %p208 = pneg %p118
      %p209 = pneg %p147
      %p210 = pneg %p144
      %s211 = smul.u32 12, %s16
      %p212 = scmp.lt.s32.totalorder %s211, 23
      %s213 = scalar_select %p212, %s211, 23
      %s214 = smul.addr %s213, 8
      %s215 = scalar_lea.vmem %s5, %s214
      %s216 = smul.u32 12, %s16
      %p217 = scmp.lt.s32.totalorder %s216, 23
      %s218 = scalar_select %p217, %s216, 23
      %s219 = smul.addr %s218, 4
      %s220 = scalar_lea.vmem %s0, %s219
      %s221 = smul.u32 12, %s16
      %s222 = smul.u32 12, %s16
      %p223 = scmp.lt.s32.totalorder %s222, 23
      %s224 = scalar_select %p223, %s222, 23
      %s225 = smul.addr %s224, 8
      %s226 = scalar_lea.vmem %s5, %s225
      %s227 = smul.u32 12, %s16
      %v229 = vld [vmem:[%s220] sm:$0xf]
      %v230 = vld [vmem:[%s220 + $0x4] sm:$0xf]
      %v231 = vld [vmem:[%s220 + $0x8] sm:$0xf]
      %v232 = vld [vmem:[%s220 + $0xc] sm:$0xf]
      %v233 = vld [vmem:[%s220 + $0x10] sm:$0xf]
      %v234 = vld [vmem:[%s220 + $0x14] sm:$0xf]
      %v235 = vld [vmem:[%s220 + $0x18] sm:$0xf]
      %v236 = vld [vmem:[%s220 + $0x1c] sm:$0xf]
      %v237 = vld [vmem:[%s220 + $0x20] sm:$0xf]
      %v238 = vld [vmem:[%s220 + $0x24] sm:$0xf]
      %v239 = vld [vmem:[%s220 + $0x28] sm:$0xf]
      %v240 = vld [vmem:[%s220 + $0x2c] sm:$0xf]
      %v241 = vld [vmem:[%s1] sm:$0xff]
      %v242 = vld [vmem:[%s1 + $0x8] sm:$0xff]
      %v243 = vld [vmem:[%s1 + $0x10] sm:$0xff]
      %v244 = vld [vmem:[%s1 + $0x18] sm:$0xff]
      %v245 = vld [vmem:[%s1 + $0x20] sm:$0xff]
      %v246 = vld [vmem:[%s1 + $0x28] sm:$0xff]
      %v247 = vld [vmem:[%s1 + $0x30] sm:$0xff]
      %v248 = vld [vmem:[%s1 + $0x38] sm:$0xff]
      %v249 = vld [vmem:[%s1 + $0x40] sm:$0xff]
      %v250 = vld [vmem:[%s1 + $0x48] sm:$0xff]
      %v251 = vld [vmem:[%s1 + $0x50] sm:$0xff]
      %v252 = vld [vmem:[%s1 + $0x58] sm:$0xff]
      %v253 = vld [vmem:[%s1 + $0x60] sm:$0xff]
      %v254 = vld [vmem:[%s1 + $0x68] sm:$0xff]
      %v255 = vld [vmem:[%s1 + $0x70] sm:$0xff]
      %v256 = vld [vmem:[%s1 + $0x78] sm:$0xff]
      %v257 = vld [vmem:[%s2] sm:$0x3]
      %v259 = vlaneseq
      %v260 = vshrl.u32 %v259, 7
      %v261 = vsub.s32 0, %v260
      %v262 = vrot.slane %v257, %v261
      %v263 = vlaneseq
      %v264 = vshrl.u32 %v263, 7
      %v265 = vsub.s32 1, %v264
      %v266 = vrot.slane %v257, %v265
      %v281 = vunpack.c.l.b16 %v229
      %v282 = vunpack.c.l.b16 %v230
      %v283 = vunpack.c.l.b16 %v231
      %v284 = vunpack.c.l.b16 %v232
      %v285 = vunpack.c.l.b16 %v233
      %v286 = vunpack.c.l.b16 %v234
      %v287 = vunpack.c.l.b16 %v235
      %v288 = vunpack.c.l.b16 %v236
      %v289 = vunpack.c.l.b16 %v237
      %v290 = vunpack.c.l.b16 %v238
      %v291 = vunpack.c.l.b16 %v239
      %v292 = vunpack.c.l.b16 %v240
      %v293 = vpack.c.b16 %v282, %v281
      %v294 = vpack.c.b16 %v284, %v283
      %v295 = vpack.c.b16 %v286, %v285
      %v296 = vpack.c.b16 %v288, %v287
      %v297 = vpack.c.b16 %v290, %v289
      %v298 = vpack.c.b16 %v292, %v291
      %v321 = vunpack.c.l.b16 %v241
      %v322 = vunpack.c.h.b16 %v241
      %v323 = vunpack.c.l.b16 %v242
      %v324 = vunpack.c.h.b16 %v242
      %v325 = vunpack.c.l.b16 %v243
      %v326 = vunpack.c.h.b16 %v243
      %v327 = vunpack.c.l.b16 %v244
      %v328 = vunpack.c.h.b16 %v244
      %v329 = vunpack.c.l.b16 %v245
      %v330 = vunpack.c.h.b16 %v245
      %v331 = vunpack.c.l.b16 %v246
      %v332 = vunpack.c.h.b16 %v246
      %v333 = vunpack.c.l.b16 %v247
      %v334 = vunpack.c.h.b16 %v247
      %v335 = vunpack.c.l.b16 %v248
      %v336 = vunpack.c.h.b16 %v248
      %v337 = vunpack.c.l.b16 %v249
      %v338 = vunpack.c.h.b16 %v249
      %v339 = vunpack.c.l.b16 %v250
      %v340 = vunpack.c.h.b16 %v250
      %v341 = vunpack.c.l.b16 %v251
      %v342 = vunpack.c.h.b16 %v251
      %v343 = vunpack.c.l.b16 %v252
      %v344 = vunpack.c.h.b16 %v252
      %v345 = vunpack.c.l.b16 %v253
      %v346 = vunpack.c.h.b16 %v253
      %v347 = vunpack.c.l.b16 %v254
      %v348 = vunpack.c.h.b16 %v254
      %v349 = vunpack.c.l.b16 %v255
      %v350 = vunpack.c.h.b16 %v255
      %v351 = vunpack.c.l.b16 %v256
      %v352 = vunpack.c.h.b16 %v256
      %v353 = vpack.c.b16 %v323, %v321
      %v354 = vpack.c.b16 %v324, %v322
      %v355 = vpack.c.b16 %v327, %v325
      %v356 = vpack.c.b16 %v328, %v326
      %v357 = vpack.c.b16 %v331, %v329
      %v358 = vpack.c.b16 %v332, %v330
      %v359 = vpack.c.b16 %v335, %v333
      %v360 = vpack.c.b16 %v336, %v334
      %v361 = vpack.c.b16 %v339, %v337
      %v362 = vpack.c.b16 %v340, %v338
      %v363 = vpack.c.b16 %v343, %v341
      %v364 = vpack.c.b16 %v344, %v342
      %v365 = vpack.c.b16 %v347, %v345
      %v366 = vpack.c.b16 %v348, %v346
      %v367 = vpack.c.b16 %v351, %v349
      %v368 = vpack.c.b16 %v352, %v350
      %385 = vmatprep.subr.bf16.mxu0 %v368
      %386 = vmatpush1.bf16.msra.mxu0 %v367
      %387 = vmatprep.subr.bf16.mxu0 %v366
      %388 = vmatpush1.bf16.msra.mxu0 %v365
      %389 = vmatprep.subr.bf16.mxu0 %v364
      %390 = vmatpush1.bf16.msra.mxu0 %v363
      %391 = vmatprep.subr.bf16.mxu0 %v362
      %392 = vmatpush1.bf16.msra.mxu0 %v361
      %393 = vmatprep.subr.bf16.mxu0 %v360
      %394 = vmatpush1.bf16.msra.mxu0 %v359
      %395 = vmatprep.subr.bf16.mxu0 %v358
      %396 = vmatpush1.bf16.msra.mxu0 %v357
      %397 = vmatprep.subr.bf16.mxu0 %v356
      %398 = vmatpush1.bf16.msra.mxu0 %v355
      %399 = vmatprep.subr.bf16.mxu0 %v354
      %400 = vmatpush1.bf16.msra.mxu0 %v353
      %401 = vmatprep.subr.bf16.mxu0 0
      %402 = vmatpush2.bf16.msra.mxu0 0
      %403 = vmatprep.subr.bf16.mxu0 0
      %404 = vmatpush2.bf16.msra.mxu0 0
      %405 = vmatprep.subr.bf16.mxu0 0
      %406 = vmatpush2.bf16.msra.mxu0 0
      %407 = vmatprep.subr.bf16.mxu0 0
      %408 = vmatpush2.bf16.msra.mxu0 0
      %409 = vmatprep.subr.bf16.mxu0 0
      %410 = vmatpush2.bf16.msra.mxu0 0
      %411 = vmatprep.subr.bf16.mxu0 0
      %412 = vmatpush2.bf16.msra.mxu0 0
      %413 = vmatprep.subr.bf16.mxu0 0
      %414 = vmatpush2.bf16.msra.mxu0 0
      %415 = vmatprep.subr.bf16.mxu0 0
      %416 = vmatpush2.bf16.msra.mxu0 0
      %417 = vmatprep.mubr.bf16.mxu0 0
      %418 = vmatmul.mubr.bf16.gmra.mxu0 %v293
      %v419 = vpop.f32.mrf.mxu0
      %v420 = vadd.f32 %v262, %v419
      %v421 = vpop.f32.mrf.mxu0
      %v422 = vadd.f32 %v266, %v421
      %v423 = vpop.f32.mrf.mxu0
      %v424 = vadd.f32 %v262, %v423
      %v425 = vpop.f32.mrf.mxu0
      %v426 = vadd.f32 %v266, %v425
      %427 = vmatprep.mubr.bf16.mxu0 0
      %428 = vmatmul.mubr.bf16.gmra.mxu0 %v294
      %v429 = vpop.f32.mrf.mxu0
      %v430 = vadd.f32 %v262, %v429
      %v431 = vpop.f32.mrf.mxu0
      %v432 = vadd.f32 %v266, %v431
      %v433 = vpop.f32.mrf.mxu0
      %v434 = vadd.f32 %v262, %v433
      %v435 = vpop.f32.mrf.mxu0
      %v436 = vadd.f32 %v266, %v435
      %437 = vmatprep.mubr.bf16.mxu0 0
      %438 = vmatmul.mubr.bf16.gmra.mxu0 %v295
      %v439 = vpop.f32.mrf.mxu0
      %v440 = vadd.f32 %v262, %v439
      %v441 = vpop.f32.mrf.mxu0
      %v442 = vadd.f32 %v266, %v441
      %v443 = vpop.f32.mrf.mxu0
      %v444 = vadd.f32 %v262, %v443
      %v445 = vpop.f32.mrf.mxu0
      %v446 = vadd.f32 %v266, %v445
      %447 = vmatprep.mubr.bf16.mxu0 0
      %448 = vmatmul.mubr.bf16.gmra.mxu0 %v296
      %v449 = vpop.f32.mrf.mxu0
      %v450 = vadd.f32 %v262, %v449
      %v451 = vpop.f32.mrf.mxu0
      %v452 = vadd.f32 %v266, %v451
      %v453 = vpop.f32.mrf.mxu0
      %v454 = vadd.f32 %v262, %v453
      %v455 = vpop.f32.mrf.mxu0
      %v456 = vadd.f32 %v266, %v455
      %457 = vmatprep.mubr.bf16.mxu0 0
      %458 = vmatmul.mubr.bf16.gmra.mxu0 %v297
      %v459 = vpop.f32.mrf.mxu0
      %v460 = vadd.f32 %v262, %v459
      %v461 = vpop.f32.mrf.mxu0
      %v462 = vadd.f32 %v266, %v461
      %v463 = vpop.f32.mrf.mxu0
      %v464 = vadd.f32 %v262, %v463
      %v465 = vpop.f32.mrf.mxu0
      %v466 = vadd.f32 %v266, %v465
      %467 = vmatprep.mubr.bf16.mxu0 0
      %468 = vmatmul.mubr.bf16.gmra.mxu0 %v298
      %v469 = vpop.f32.mrf.mxu0
      %v470 = vadd.f32 %v262, %v469
      %v471 = vpop.f32.mrf.mxu0
      %v472 = vadd.f32 %v266, %v471
      %v473 = vpop.f32.mrf.mxu0
      %v474 = vadd.f32 %v262, %v473
      %v475 = vpop.f32.mrf.mxu0
      %v476 = vadd.f32 %v266, %v475
      %477 = vdwg.mxu0
      %v478 = vmul.f32 %v420, 0.5
      %v479 = vmul.f32 %v422, 0.5
      %v480 = vmul.f32 %v424, 0.5
      %v481 = vmul.f32 %v426, 0.5
      %v482 = vmul.f32 %v430, 0.5
      %v483 = vmul.f32 %v432, 0.5
      %v484 = vmul.f32 %v434, 0.5
      %v485 = vmul.f32 %v436, 0.5
      %v486 = vmul.f32 %v440, 0.5
      %v487 = vmul.f32 %v442, 0.5
      %v488 = vmul.f32 %v444, 0.5
      %v489 = vmul.f32 %v446, 0.5
      %v490 = vmul.f32 %v450, 0.5
      %v491 = vmul.f32 %v452, 0.5
      %v492 = vmul.f32 %v454, 0.5
      %v493 = vmul.f32 %v456, 0.5
      %v494 = vmul.f32 %v460, 0.5
      %v495 = vmul.f32 %v462, 0.5
      %v496 = vmul.f32 %v464, 0.5
      %v497 = vmul.f32 %v466, 0.5
      %v498 = vmul.f32 %v470, 0.5
      %v499 = vmul.f32 %v472, 0.5
      %v500 = vmul.f32 %v474, 0.5
      %v501 = vmul.f32 %v476, 0.5
      %v502 = vmul.f32 %v420, 0.044715
      %v503 = vmul.f32 %v422, 0.044715
      %v504 = vmul.f32 %v424, 0.044715
      %v505 = vmul.f32 %v426, 0.044715
      %v506 = vmul.f32 %v430, 0.044715
      %v507 = vmul.f32 %v432, 0.044715
      %v508 = vmul.f32 %v434, 0.044715
      %v509 = vmul.f32 %v436, 0.044715
      %v510 = vmul.f32 %v440, 0.044715
      %v511 = vmul.f32 %v442, 0.044715
      %v512 = vmul.f32 %v444, 0.044715
      %v513 = vmul.f32 %v446, 0.044715
      %v514 = vmul.f32 %v450, 0.044715
      %v515 = vmul.f32 %v452, 0.044715
      %v516 = vmul.f32 %v454, 0.044715
      %v517 = vmul.f32 %v456, 0.044715
      %v518 = vmul.f32 %v460, 0.044715
      %v519 = vmul.f32 %v462, 0.044715
      %v520 = vmul.f32 %v464, 0.044715
      %v521 = vmul.f32 %v466, 0.044715
      %v522 = vmul.f32 %v470, 0.044715
      %v523 = vmul.f32 %v472, 0.044715
      %v524 = vmul.f32 %v474, 0.044715
      %v525 = vmul.f32 %v476, 0.044715
      %v526 = vmul.f32 %v502, %v420
      %v527 = vmul.f32 %v503, %v422
      %v528 = vmul.f32 %v504, %v424
      %v529 = vmul.f32 %v505, %v426
      %v530 = vmul.f32 %v506, %v430
      %v531 = vmul.f32 %v507, %v432
      %v532 = vmul.f32 %v508, %v434
      %v533 = vmul.f32 %v509, %v436
      %v534 = vmul.f32 %v510, %v440
      %v535 = vmul.f32 %v511, %v442
      %v536 = vmul.f32 %v512, %v444
      %v537 = vmul.f32 %v513, %v446
      %v538 = vmul.f32 %v514, %v450
      %v539 = vmul.f32 %v515, %v452
      %v540 = vmul.f32 %v516, %v454
      %v541 = vmul.f32 %v517, %v456
      %v542 = vmul.f32 %v518, %v460
      %v543 = vmul.f32 %v519, %v462
      %v544 = vmul.f32 %v520, %v464
      %v545 = vmul.f32 %v521, %v466
      %v546 = vmul.f32 %v522, %v470
      %v547 = vmul.f32 %v523, %v472
      %v548 = vmul.f32 %v524, %v474
      %v549 = vmul.f32 %v525, %v476
      %v550 = vmul.f32 %v526, %v420
      %v551 = vmul.f32 %v527, %v422
      %v552 = vmul.f32 %v528, %v424
      %v553 = vmul.f32 %v529, %v426
      %v554 = vmul.f32 %v530, %v430
      %v555 = vmul.f32 %v531, %v432
      %v556 = vmul.f32 %v532, %v434
      %v557 = vmul.f32 %v533, %v436
      %v558 = vmul.f32 %v534, %v440
      %v559 = vmul.f32 %v535, %v442
      %v560 = vmul.f32 %v536, %v444
      %v561 = vmul.f32 %v537, %v446
      %v562 = vmul.f32 %v538, %v450
      %v563 = vmul.f32 %v539, %v452
      %v564 = vmul.f32 %v540, %v454
      %v565 = vmul.f32 %v541, %v456
      %v566 = vmul.f32 %v542, %v460
      %v567 = vmul.f32 %v543, %v462
      %v568 = vmul.f32 %v544, %v464
      %v569 = vmul.f32 %v545, %v466
      %v570 = vmul.f32 %v546, %v470
      %v571 = vmul.f32 %v547, %v472
      %v572 = vmul.f32 %v548, %v474
      %v573 = vmul.f32 %v549, %v476
      %v574 = vadd.f32 %v420, %v550
      %v575 = vadd.f32 %v422, %v551
      %v576 = vadd.f32 %v424, %v552
      %v577 = vadd.f32 %v426, %v553
      %v578 = vadd.f32 %v430, %v554
      %v579 = vadd.f32 %v432, %v555
      %v580 = vadd.f32 %v434, %v556
      %v581 = vadd.f32 %v436, %v557
      %v582 = vadd.f32 %v440, %v558
      %v583 = vadd.f32 %v442, %v559
      %v584 = vadd.f32 %v444, %v560
      %v585 = vadd.f32 %v446, %v561
      %v586 = vadd.f32 %v450, %v562
      %v587 = vadd.f32 %v452, %v563
      %v588 = vadd.f32 %v454, %v564
      %v589 = vadd.f32 %v456, %v565
      %v590 = vadd.f32 %v460, %v566
      %v591 = vadd.f32 %v462, %v567
      %v592 = vadd.f32 %v464, %v568
      %v593 = vadd.f32 %v466, %v569
      %v594 = vadd.f32 %v470, %v570
      %v595 = vadd.f32 %v472, %v571
      %v596 = vadd.f32 %v474, %v572
      %v597 = vadd.f32 %v476, %v573
      %v598 = vmul.f32 %v574, 0.7978846
      %v599 = vmul.f32 %v575, 0.7978846
      %v600 = vmul.f32 %v576, 0.7978846
      %v601 = vmul.f32 %v577, 0.7978846
      %v602 = vmul.f32 %v578, 0.7978846
      %v603 = vmul.f32 %v579, 0.7978846
      %v604 = vmul.f32 %v580, 0.7978846
      %v605 = vmul.f32 %v581, 0.7978846
      %v606 = vmul.f32 %v582, 0.7978846
      %v607 = vmul.f32 %v583, 0.7978846
      %v608 = vmul.f32 %v584, 0.7978846
      %v609 = vmul.f32 %v585, 0.7978846
      %v610 = vmul.f32 %v586, 0.7978846
      %v611 = vmul.f32 %v587, 0.7978846
      %v612 = vmul.f32 %v588, 0.7978846
      %v613 = vmul.f32 %v589, 0.7978846
      %v614 = vmul.f32 %v590, 0.7978846
      %v615 = vmul.f32 %v591, 0.7978846
      %v616 = vmul.f32 %v592, 0.7978846
      %v617 = vmul.f32 %v593, 0.7978846
      %v618 = vmul.f32 %v594, 0.7978846
      %v619 = vmul.f32 %v595, 0.7978846
      %v620 = vmul.f32 %v596, 0.7978846
      %v621 = vmul.f32 %v597, 0.7978846
      %v622 = vtanh.pop %v598
      %v623 = vtanh.pop %v599
      %v624 = vtanh.pop %v600
      %v625 = vtanh.pop %v601
      %v626 = vtanh.pop %v602
      %v627 = vtanh.pop %v603
      %v628 = vtanh.pop %v604
      %v629 = vtanh.pop %v605
      %v630 = vtanh.pop %v606
      %v631 = vtanh.pop %v607
      %v632 = vtanh.pop %v608
      %v633 = vtanh.pop %v609
      %v634 = vtanh.pop %v610
      %v635 = vtanh.pop %v611
      %v636 = vtanh.pop %v612
      %v637 = vtanh.pop %v613
      %v638 = vtanh.pop %v614
      %v639 = vtanh.pop %v615
      %v640 = vtanh.pop %v616
      %v641 = vtanh.pop %v617
      %v642 = vtanh.pop %v618
      %v643 = vtanh.pop %v619
      %v644 = vtanh.pop %v620
      %v645 = vtanh.pop %v621
      %v646 = vadd.f32 %v622, 1.0
      %v647 = vadd.f32 %v623, 1.0
      %v648 = vadd.f32 %v624, 1.0
      %v649 = vadd.f32 %v625, 1.0
      %v650 = vadd.f32 %v626, 1.0
      %v651 = vadd.f32 %v627, 1.0
      %v652 = vadd.f32 %v628, 1.0
      %v653 = vadd.f32 %v629, 1.0
      %v654 = vadd.f32 %v630, 1.0
      %v655 = vadd.f32 %v631, 1.0
      %v656 = vadd.f32 %v632, 1.0
      %v657 = vadd.f32 %v633, 1.0
      %v658 = vadd.f32 %v634, 1.0
      %v659 = vadd.f32 %v635, 1.0
      %v660 = vadd.f32 %v636, 1.0
      %v661 = vadd.f32 %v637, 1.0
      %v662 = vadd.f32 %v638, 1.0
      %v663 = vadd.f32 %v639, 1.0
      %v664 = vadd.f32 %v640, 1.0
      %v665 = vadd.f32 %v641, 1.0
      %v666 = vadd.f32 %v642, 1.0
      %v667 = vadd.f32 %v643, 1.0
      %v668 = vadd.f32 %v644, 1.0
      %v669 = vadd.f32 %v645, 1.0
      %v670 = vmul.f32 %v478, %v646
      %v671 = vmul.f32 %v479, %v647
      %v672 = vmul.f32 %v480, %v648
      %v673 = vmul.f32 %v481, %v649
      %v674 = vmul.f32 %v482, %v650
      %v675 = vmul.f32 %v483, %v651
      %v676 = vmul.f32 %v484, %v652
      %v677 = vmul.f32 %v485, %v653
      %v678 = vmul.f32 %v486, %v654
      %v679 = vmul.f32 %v487, %v655
      %v680 = vmul.f32 %v488, %v656
      %v681 = vmul.f32 %v489, %v657
      %v682 = vmul.f32 %v490, %v658
      %v683 = vmul.f32 %v491, %v659
      %v684 = vmul.f32 %v492, %v660
      %v685 = vmul.f32 %v493, %v661
      %v686 = vmul.f32 %v494, %v662
      %v687 = vmul.f32 %v495, %v663
      %v688 = vmul.f32 %v496, %v664
      %v689 = vmul.f32 %v497, %v665
      %v690 = vmul.f32 %v498, %v666
      %v691 = vmul.f32 %v499, %v667
      %v692 = vmul.f32 %v500, %v668
      %v693 = vmul.f32 %v501, %v669
      %v694 = vpack.c.bf16 %v672, %v670
      %v695 = vpack.c.bf16 %v673, %v671
      %v696 = vpack.c.bf16 %v676, %v674
      %v697 = vpack.c.bf16 %v677, %v675
      %v698 = vpack.c.bf16 %v680, %v678
      %v699 = vpack.c.bf16 %v681, %v679
      %v700 = vpack.c.bf16 %v684, %v682
      %v701 = vpack.c.bf16 %v685, %v683
      %v702 = vpack.c.bf16 %v688, %v686
      %v703 = vpack.c.bf16 %v689, %v687
      %v704 = vpack.c.bf16 %v692, %v690
      %v705 = vpack.c.bf16 %v693, %v691
      %v706 = vld [vmem:[%s3] sm:$0xf]
      %v707 = vld [vmem:[%s3 + $0x4] sm:$0xf]
      %v708 = vld [vmem:[%s3 + $0x8] sm:$0xf]
      %v709 = vld [vmem:[%s3 + $0xc] sm:$0xf]
      %v710 = vld [vmem:[%s3 + $0x10] sm:$0xf]
      %v711 = vld [vmem:[%s3 + $0x14] sm:$0xf]
      %v712 = vld [vmem:[%s3 + $0x18] sm:$0xf]
      %v713 = vld [vmem:[%s3 + $0x1c] sm:$0xf]
      %v714 = vld [vmem:[%s3 + $0x20] sm:$0xf]
      %v715 = vld [vmem:[%s3 + $0x24] sm:$0xf]
      %v716 = vld [vmem:[%s3 + $0x28] sm:$0xf]
      %v717 = vld [vmem:[%s3 + $0x2c] sm:$0xf]
      %v718 = vld [vmem:[%s3 + $0x30] sm:$0xf]
      %v719 = vld [vmem:[%s3 + $0x34] sm:$0xf]
      %v720 = vld [vmem:[%s3 + $0x38] sm:$0xf]
      %v721 = vld [vmem:[%s3 + $0x3c] sm:$0xf]
      %v722 = vld [vmem:[%s3 + $0x40] sm:$0xf]
      %v723 = vld [vmem:[%s3 + $0x44] sm:$0xf]
      %v724 = vld [vmem:[%s3 + $0x48] sm:$0xf]
      %v725 = vld [vmem:[%s3 + $0x4c] sm:$0xf]
      %v726 = vld [vmem:[%s3 + $0x50] sm:$0xf]
      %v727 = vld [vmem:[%s3 + $0x54] sm:$0xf]
      %v728 = vld [vmem:[%s3 + $0x58] sm:$0xf]
      %v729 = vld [vmem:[%s3 + $0x5c] sm:$0xf]
      %v730 = vld [vmem:[%s3 + $0x60] sm:$0xf]
      %v731 = vld [vmem:[%s3 + $0x64] sm:$0xf]
      %v732 = vld [vmem:[%s3 + $0x68] sm:$0xf]
      %v733 = vld [vmem:[%s3 + $0x6c] sm:$0xf]
      %v734 = vld [vmem:[%s3 + $0x70] sm:$0xf]
      %v735 = vld [vmem:[%s3 + $0x74] sm:$0xf]
      %v736 = vld [vmem:[%s3 + $0x78] sm:$0xf]
      %v737 = vld [vmem:[%s3 + $0x7c] sm:$0xf]
      %v738 = vld [vmem:[%s4] sm:$0x1]
      %v740 = vlaneseq
      %v741 = vshrl.u32 %v740, 7
      %v742 = vsub.s32 0, %v741
      %v743 = vrot.slane %v738, %v742
      %v777 = vunpack.c.l.b16 %v706
      %v778 = vunpack.c.l.b16 %v707
      %v779 = vunpack.c.l.b16 %v708
      %v780 = vunpack.c.l.b16 %v709
      %v781 = vunpack.c.l.b16 %v710
      %v782 = vunpack.c.l.b16 %v711
      %v783 = vunpack.c.l.b16 %v712
      %v784 = vunpack.c.l.b16 %v713
      %v785 = vunpack.c.l.b16 %v714
      %v786 = vunpack.c.l.b16 %v715
      %v787 = vunpack.c.l.b16 %v716
      %v788 = vunpack.c.l.b16 %v717
      %v789 = vunpack.c.l.b16 %v718
      %v790 = vunpack.c.l.b16 %v719
      %v791 = vunpack.c.l.b16 %v720
      %v792 = vunpack.c.l.b16 %v721
      %v793 = vunpack.c.l.b16 %v722
      %v794 = vunpack.c.l.b16 %v723
      %v795 = vunpack.c.l.b16 %v724
      %v796 = vunpack.c.l.b16 %v725
      %v797 = vunpack.c.l.b16 %v726
      %v798 = vunpack.c.l.b16 %v727
      %v799 = vunpack.c.l.b16 %v728
      %v800 = vunpack.c.l.b16 %v729
      %v801 = vunpack.c.l.b16 %v730
      %v802 = vunpack.c.l.b16 %v731
      %v803 = vunpack.c.l.b16 %v732
      %v804 = vunpack.c.l.b16 %v733
      %v805 = vunpack.c.l.b16 %v734
      %v806 = vunpack.c.l.b16 %v735
      %v807 = vunpack.c.l.b16 %v736
      %v808 = vunpack.c.l.b16 %v737
      %v809 = vpack.c.b16 %v778, %v777
      %v810 = vpack.c.b16 %v780, %v779
      %v811 = vpack.c.b16 %v782, %v781
      %v812 = vpack.c.b16 %v784, %v783
      %v813 = vpack.c.b16 %v786, %v785
      %v814 = vpack.c.b16 %v788, %v787
      %v815 = vpack.c.b16 %v790, %v789
      %v816 = vpack.c.b16 %v792, %v791
      %v817 = vpack.c.b16 %v794, %v793
      %v818 = vpack.c.b16 %v796, %v795
      %v819 = vpack.c.b16 %v798, %v797
      %v820 = vpack.c.b16 %v800, %v799
      %v821 = vpack.c.b16 %v802, %v801
      %v822 = vpack.c.b16 %v804, %v803
      %v823 = vpack.c.b16 %v806, %v805
      %v824 = vpack.c.b16 %v808, %v807
      %841 = vmatprep.subr.bf16.mxu0 0
      %842 = vmatpush1.bf16.msra.mxu0 %v816
      %843 = vmatprep.subr.bf16.mxu0 0
      %844 = vmatpush1.bf16.msra.mxu0 %v815
      %845 = vmatprep.subr.bf16.mxu0 0
      %846 = vmatpush1.bf16.msra.mxu0 %v814
      %847 = vmatprep.subr.bf16.mxu0 0
      %848 = vmatpush1.bf16.msra.mxu0 %v813
      %849 = vmatprep.subr.bf16.mxu0 0
      %850 = vmatpush1.bf16.msra.mxu0 %v812
      %851 = vmatprep.subr.bf16.mxu0 0
      %852 = vmatpush1.bf16.msra.mxu0 %v811
      %853 = vmatprep.subr.bf16.mxu0 0
      %854 = vmatpush1.bf16.msra.mxu0 %v810
      %855 = vmatprep.subr.bf16.mxu0 0
      %856 = vmatpush1.bf16.msra.mxu0 %v809
      %857 = vmatprep.subr.bf16.mxu0 0
      %858 = vmatpush2.bf16.msra.mxu0 %v824
      %859 = vmatprep.subr.bf16.mxu0 0
      %860 = vmatpush2.bf16.msra.mxu0 %v823
      %861 = vmatprep.subr.bf16.mxu0 0
      %862 = vmatpush2.bf16.msra.mxu0 %v822
      %863 = vmatprep.subr.bf16.mxu0 0
      %864 = vmatpush2.bf16.msra.mxu0 %v821
      %865 = vmatprep.subr.bf16.mxu0 0
      %866 = vmatpush2.bf16.msra.mxu0 %v820
      %867 = vmatprep.subr.bf16.mxu0 0
      %868 = vmatpush2.bf16.msra.mxu0 %v819
      %869 = vmatprep.subr.bf16.mxu0 0
      %870 = vmatpush2.bf16.msra.mxu0 %v818
      %871 = vmatprep.subr.bf16.mxu0 0
      %872 = vmatpush2.bf16.msra.mxu0 %v817
      %873 = vmatprep.mubr.bf16.mxu0 %v695
      %874 = vmatmul.mubr.bf16.gmra.mxu0 %v694
      %v875 = vpop.f32.mrf.mxu0
      %v876 = vadd.f32 %v743, %v875
      %v877 = vpop.f32.mrf.mxu0
      %v878 = vpop.f32.mrf.mxu0
      %v879 = vadd.f32 %v743, %v878
      %v880 = vpop.f32.mrf.mxu0
      %881 = vmatprep.mubr.bf16.mxu0 %v697
      %882 = vmatmul.mubr.bf16.gmra.mxu0 %v696
      %v883 = vpop.f32.mrf.mxu0
      %v884 = vadd.f32 %v743, %v883
      %v885 = vpop.f32.mrf.mxu0
      %v886 = vpop.f32.mrf.mxu0
      %v887 = vadd.f32 %v743, %v886
      %v888 = vpop.f32.mrf.mxu0
      %889 = vmatprep.mubr.bf16.mxu0 %v699
      %890 = vmatmul.mubr.bf16.gmra.mxu0 %v698
      %v891 = vpop.f32.mrf.mxu0
      %v892 = vadd.f32 %v743, %v891
      %v893 = vpop.f32.mrf.mxu0
      %v894 = vpop.f32.mrf.mxu0
      %v895 = vadd.f32 %v743, %v894
      %v896 = vpop.f32.mrf.mxu0
      %897 = vmatprep.mubr.bf16.mxu0 %v701
      %898 = vmatmul.mubr.bf16.gmra.mxu0 %v700
      %v899 = vpop.f32.mrf.mxu0
      %v900 = vadd.f32 %v743, %v899
      %v901 = vpop.f32.mrf.mxu0
      %v902 = vpop.f32.mrf.mxu0
      %v903 = vadd.f32 %v743, %v902
      %v904 = vpop.f32.mrf.mxu0
      %905 = vmatprep.mubr.bf16.mxu0 %v703
      %906 = vmatmul.mubr.bf16.gmra.mxu0 %v702
      %v907 = vpop.f32.mrf.mxu0
      %v908 = vadd.f32 %v743, %v907
      %v909 = vpop.f32.mrf.mxu0
      %v910 = vpop.f32.mrf.mxu0
      %v911 = vadd.f32 %v743, %v910
      %v912 = vpop.f32.mrf.mxu0
      %913 = vmatprep.mubr.bf16.mxu0 %v705
      %914 = vmatmul.mubr.bf16.gmra.mxu0 %v704
      %v915 = vpop.f32.mrf.mxu0
      %v916 = vadd.f32 %v743, %v915
      %v917 = vpop.f32.mrf.mxu0
      %v918 = vpop.f32.mrf.mxu0
      %v919 = vadd.f32 %v743, %v918
      %v920 = vpop.f32.mrf.mxu0
      %921 = vdwg.mxu0
      %v922 = vmul.f32 %v876, 0.5
      %v923 = vmul.f32 %v879, 0.5
      %v924 = vmul.f32 %v884, 0.5
      %v925 = vmul.f32 %v887, 0.5
      %v926 = vmul.f32 %v892, 0.5
      %v927 = vmul.f32 %v895, 0.5
      %v928 = vmul.f32 %v900, 0.5
      %v929 = vmul.f32 %v903, 0.5
      %v930 = vmul.f32 %v908, 0.5
      %v931 = vmul.f32 %v911, 0.5
      %v932 = vmul.f32 %v916, 0.5
      %v933 = vmul.f32 %v919, 0.5
      %v934 = vmul.f32 %v876, 0.044715
      %v935 = vmul.f32 %v879, 0.044715
      %v936 = vmul.f32 %v884, 0.044715
      %v937 = vmul.f32 %v887, 0.044715
      %v938 = vmul.f32 %v892, 0.044715
      %v939 = vmul.f32 %v895, 0.044715
      %v940 = vmul.f32 %v900, 0.044715
      %v941 = vmul.f32 %v903, 0.044715
      %v942 = vmul.f32 %v908, 0.044715
      %v943 = vmul.f32 %v911, 0.044715
      %v944 = vmul.f32 %v916, 0.044715
      %v945 = vmul.f32 %v919, 0.044715
      %v946 = vmul.f32 %v934, %v876
      %v947 = vmul.f32 %v935, %v879
      %v948 = vmul.f32 %v936, %v884
      %v949 = vmul.f32 %v937, %v887
      %v950 = vmul.f32 %v938, %v892
      %v951 = vmul.f32 %v939, %v895
      %v952 = vmul.f32 %v940, %v900
      %v953 = vmul.f32 %v941, %v903
      %v954 = vmul.f32 %v942, %v908
      %v955 = vmul.f32 %v943, %v911
      %v956 = vmul.f32 %v944, %v916
      %v957 = vmul.f32 %v945, %v919
      %v958 = vmul.f32 %v946, %v876
      %v959 = vmul.f32 %v947, %v879
      %v960 = vmul.f32 %v948, %v884
      %v961 = vmul.f32 %v949, %v887
      %v962 = vmul.f32 %v950, %v892
      %v963 = vmul.f32 %v951, %v895
      %v964 = vmul.f32 %v952, %v900
      %v965 = vmul.f32 %v953, %v903
      %v966 = vmul.f32 %v954, %v908
      %v967 = vmul.f32 %v955, %v911
      %v968 = vmul.f32 %v956, %v916
      %v969 = vmul.f32 %v957, %v919
      %v970 = vadd.f32 %v876, %v958
      %v971 = vadd.f32 %v879, %v959
      %v972 = vadd.f32 %v884, %v960
      %v973 = vadd.f32 %v887, %v961
      %v974 = vadd.f32 %v892, %v962
      %v975 = vadd.f32 %v895, %v963
      %v976 = vadd.f32 %v900, %v964
      %v977 = vadd.f32 %v903, %v965
      %v978 = vadd.f32 %v908, %v966
      %v979 = vadd.f32 %v911, %v967
      %v980 = vadd.f32 %v916, %v968
      %v981 = vadd.f32 %v919, %v969
      %v982 = vmul.f32 %v970, 0.7978846
      %v983 = vmul.f32 %v971, 0.7978846
      %v984 = vmul.f32 %v972, 0.7978846
      %v985 = vmul.f32 %v973, 0.7978846
      %v986 = vmul.f32 %v974, 0.7978846
      %v987 = vmul.f32 %v975, 0.7978846
      %v988 = vmul.f32 %v976, 0.7978846
      %v989 = vmul.f32 %v977, 0.7978846
      %v990 = vmul.f32 %v978, 0.7978846
      %v991 = vmul.f32 %v979, 0.7978846
      %v992 = vmul.f32 %v980, 0.7978846
      %v993 = vmul.f32 %v981, 0.7978846
      %v994 = vtanh.pop %v982
      %v995 = vtanh.pop %v983
      %v996 = vtanh.pop %v984
      %v997 = vtanh.pop %v985
      %v998 = vtanh.pop %v986
      %v999 = vtanh.pop %v987
      %v1000 = vtanh.pop %v988
      %v1001 = vtanh.pop %v989
      %v1002 = vtanh.pop %v990
      %v1003 = vtanh.pop %v991
      %v1004 = vtanh.pop %v992
      %v1005 = vtanh.pop %v993
      %v1006 = vadd.f32 %v994, 1.0
      %v1007 = vadd.f32 %v995, 1.0
      %v1008 = vadd.f32 %v996, 1.0
      %v1009 = vadd.f32 %v997, 1.0
      %v1010 = vadd.f32 %v998, 1.0
      %v1011 = vadd.f32 %v999, 1.0
      %v1012 = vadd.f32 %v1000, 1.0
      %v1013 = vadd.f32 %v1001, 1.0
      %v1014 = vadd.f32 %v1002, 1.0
      %v1015 = vadd.f32 %v1003, 1.0
      %v1016 = vadd.f32 %v1004, 1.0
      %v1017 = vadd.f32 %v1005, 1.0
      %v1018 = vmul.f32 %v922, %v1006
      %v1019 = vmul.f32 %v923, %v1007
      %v1020 = vmul.f32 %v924, %v1008
      %v1021 = vmul.f32 %v925, %v1009
      %v1022 = vmul.f32 %v926, %v1010
      %v1023 = vmul.f32 %v927, %v1011
      %v1024 = vmul.f32 %v928, %v1012
      %v1025 = vmul.f32 %v929, %v1013
      %v1026 = vmul.f32 %v930, %v1014
      %v1027 = vmul.f32 %v931, %v1015
      %v1028 = vmul.f32 %v932, %v1016
      %v1029 = vmul.f32 %v933, %v1017
      %1030 = vst [vmem:[%s226] sm:$0xff] %v1018
      %1031 = vst [vmem:[%s226 + $0x8] sm:$0xff] %v1019
      %1032 = vst [vmem:[%s226 + $0x10] sm:$0xff] %v1020
      %1033 = vst [vmem:[%s226 + $0x18] sm:$0xff] %v1021
      %1034 = vst [vmem:[%s226 + $0x20] sm:$0xff] %v1022
      %1035 = vst [vmem:[%s226 + $0x28] sm:$0xff] %v1023
      %1036 = vst [vmem:[%s226 + $0x30] sm:$0xff] %v1024
      %1037 = vst [vmem:[%s226 + $0x38] sm:$0xff] %v1025
      %1038 = vst [vmem:[%s226 + $0x40] sm:$0xff] %v1026
      %1039 = vst [vmem:[%s226 + $0x48] sm:$0xff] %v1027
      %1040 = vst [vmem:[%s226 + $0x50] sm:$0xff] %v1028
      %1041 = vst [vmem:[%s226 + $0x58] sm:$0xff] %v1029
      %s1042 = smul.u32 12, %s16
      %p1043 = scmp.lt.s32.totalorder %s1042, 23
      %s1044 = scalar_select %p1043, %s1042, 23
      %s1045 = smul.addr %s1044, 8
      %s1046 = scalar_lea.vmem %s5, %s1045
      // Predicated region
      $region41: #{_lambda_.3} parent=39 // pred_check
        %p1047 = pneg %p144
      $region42: #{_lambda_.3} parent=39 // pred_check_branch
        %1049 = sbr.rel (%p1047) target = $region44
      $region43: #{_lambda_.3} parent=39 // pred_region
        %s1050 = smul.u32 12, %s16
      $region44: #{_lambda_.3} parent=39 // pred_fallthru
        _
    $region40: #{_lambda_.3} parent=5 // pred_fallthru
      _
    %p1051 = scmp.le.s32.totalorder 2, %s11
    // Predicated region
    $region45: #{_lambda_.3} parent=5 // pred_check
      %p1052 = pneg %p1051
    $region46: #{_lambda_.3} parent=5 // pred_check_branch
      %1054 = sbr.rel (%p1052) target = $region48
    $region47: #{_lambda_.3} parent=5 // pred_region
      %s1055 = ssub.s32 %s11, 2
      // Predicated region
      $region49: #{_lambda_.3} parent=47 // pred_check
        %p1056 = pneg %p150
      $region50: #{_lambda_.3} parent=47 // pred_check_branch
        %1058 = sbr.rel (%p1056) target = $region52
      $region51: #{_lambda_.3} parent=47 // pred_region
        %s1059 = smul.u32 12, %s17
        %p1060 = scmp.lt.s32.totalorder %s1059, 23
        %s1061 = scalar_select %p1060, %s1059, 23
        %s1062 = smul.addr %s1061, 8
        %s1063 = scalar_lea.vmem %s5, %s1062
      $region52: #{_lambda_.3} parent=47 // pred_fallthru
        _
    $region48: #{_lambda_.3} parent=5 // pred_fallthru
      _
  $region6: #{_lambda_.3} parent=0 // loop_footer
    %s15 = sadd.s32 1, %s11
  $region7: #{_lambda_.3} parent=0 // loop_footer_branch
    %10 = sbr.rel target = $region3
  $region8: #{_lambda_.3} parent=0 // loop_exit
    _

// kernel: _lambda_.2
$region0: #{_lambda_.2}
  #allocation0 [shape = 'u32[]', space=smem, size = 0x4, offset = 0x4, fixed_abs, tag = 'smem constant byte address 0x4 - core index']
  #allocation1 [shape = 'u32[144,128]{1,0:T(1,128)}', space=vmem, size = 0x12000, scoped, tag = 'internal scratch']
  %s0 = inlined_call_operand.vmem [shape: bf16[128,512], index: 0, kind: input, shape index: {}]
  %s1 = inlined_call_operand.vmem [shape: bf16[512,256], index: 1, kind: input, shape index: {}]
  %s2 = inlined_call_operand.vmem [shape: f32[1,256], index: 2, kind: input, shape index: {}]
  %s3 = inlined_call_operand.vmem [shape: bf16[256,128], index: 3, kind: input, shape index: {}]
  %s4 = inlined_call_operand.vmem [shape: f32[1,128], index: 4, kind: input, shape index: {}]
  %s5 = inlined_call_operand.vmem [shape: bf16[512,128], index: 5, kind: input, shape index: {}]
  %s6 = inlined_call_operand.vmem [shape: bf16[128,128], index: 6, kind: output, shape index: {}]
  %s7 = sld [smem:[#allocation0]]
  $region57: #{_lambda_.2} parent=0
    _
  %s9 = ssub.s32 1, %s7
  %s10 = scalar_select 0, %s9, %s7
  loop: start=0, step=1, limit=4
  $region2: #{_lambda_.2} parent=0 // loop_pre_header
    _
  $region3: #{_lambda_.2} parent=0 // loop_header
    %s12 = sphi 0, %s16
    %p13 = scmp.ge.s32.totalorder %s12, 4
    %s22 = sphi 0, %s24
    %s25 = sphi 0, %s22
    %s26 = sphi 0, %s25
    %s42 = sphi 0, %s26
    %s46 = sphi 0, %s46
    %s48 = sphi 0, %s46
    %s49 = sphi 0, %s48
    %s63 = sphi 0, %s49
    %s67 = sphi 0, %s67
    %s69 = sphi 0, %s67
    %s70 = sphi 0, %s69
    %s84 = sphi 0, %s70
    %s88 = sphi 0, %s88
    %s90 = sphi 0, %s88
    %s91 = sphi 0, %s90
    %s105 = sphi 0, %s91
    %s109 = sphi 0, %s109
    %s111 = sphi 0, %s109
    %s112 = sphi 0, %s111
    %s126 = sphi 0, %s112
    %s130 = sphi 0, %s130
    %s132 = sphi 0, %s130
    %s133 = sphi 0, %s132
    %s147 = sphi 0, %s133
    %s153 = sphi 0, %s155
    %s156 = sphi 0, %s153
    %s157 = sphi 0, %s156
    %s173 = sphi 0, %s157
  $region4: #{_lambda_.2} parent=0 // loop_header_branch
    %15 = sbr.rel (%p13) target = $region8
  $region5: #{_lambda_.2} parent=0 // loop_body
    %s17 = ssub.s32 %s12, 1
    %s18 = ssub.s32 %s12, 2
    %s19 = sadd.s32 %s12, 1
    %s20 = ssub.s32 %s12, %s19
    %p21 = scmp.eq.s32.totalorder %s20, 0
    %s23 = sadd.s32 %s22, 1
    %s24 = scalar_select %p21, %s22, %s23
    %p27 = pneg %p21
    %p28 = scmp.eq.s32.totalorder %s12, 1
    %p29 = por %p27, %p28
    %p30 = scmp.ne.s32.totalorder %s22, %s25
    %p31 = scmp.eq.s32.totalorder %s12, 0
    %p32 = por %p30, %p31
    %p33 = scmp.ne.s32.totalorder %s22, %s25
    %p34 = scmp.eq.s32.totalorder %s17, 1
    %p35 = por %p33, %p34
    %p36 = scmp.ne.s32.totalorder %s25, %s26
    %p37 = scmp.eq.s32.totalorder %s17, 0
    %p38 = por %p36, %p37
    %p39 = scmp.ne.s32.totalorder %s25, %s26
    %p40 = scmp.eq.s32.totalorder %s18, 1
    %p41 = por %p39, %p40
    %p43 = scmp.ne.s32.totalorder %s26, %s42
    %p44 = scmp.eq.s32.totalorder %s18, 0
    %p45 = por %p43, %p44
    %s47 = sadd.s32 %s46, 1
    %p50 = scmp.eq.s32.totalorder %s12, 1
    %p51 = scmp.ne.s32.totalorder %s46, %s48
    %p52 = scmp.eq.s32.totalorder %s12, 0
    %p53 = por %p51, %p52
    %p54 = scmp.ne.s32.totalorder %s46, %s48
    %p55 = scmp.eq.s32.totalorder %s17, 1
    %p56 = por %p54, %p55
    %p57 = scmp.ne.s32.totalorder %s48, %s49
    %p58 = scmp.eq.s32.totalorder %s17, 0
    %p59 = por %p57, %p58
    %p60 = scmp.ne.s32.totalorder %s48, %s49
    %p61 = scmp.eq.s32.totalorder %s18, 1
    %p62 = por %p60, %p61
    %p64 = scmp.ne.s32.totalorder %s49, %s63
    %p65 = scmp.eq.s32.totalorder %s18, 0
    %p66 = por %p64, %p65
    %s68 = sadd.s32 %s67, 1
    %p71 = scmp.eq.s32.totalorder %s12, 1
    %p72 = scmp.ne.s32.totalorder %s67, %s69
    %p73 = scmp.eq.s32.totalorder %s12, 0
    %p74 = por %p72, %p73
    %p75 = scmp.ne.s32.totalorder %s67, %s69
    %p76 = scmp.eq.s32.totalorder %s17, 1
    %p77 = por %p75, %p76
    %p78 = scmp.ne.s32.totalorder %s69, %s70
    %p79 = scmp.eq.s32.totalorder %s17, 0
    %p80 = por %p78, %p79
    %p81 = scmp.ne.s32.totalorder %s69, %s70
    %p82 = scmp.eq.s32.totalorder %s18, 1
    %p83 = por %p81, %p82
    %p85 = scmp.ne.s32.totalorder %s70, %s84
    %p86 = scmp.eq.s32.totalorder %s18, 0
    %p87 = por %p85, %p86
    %s89 = sadd.s32 %s88, 1
    %p92 = scmp.eq.s32.totalorder %s12, 1
    %p93 = scmp.ne.s32.totalorder %s88, %s90
    %p94 = scmp.eq.s32.totalorder %s12, 0
    %p95 = por %p93, %p94
    %p96 = scmp.ne.s32.totalorder %s88, %s90
    %p97 = scmp.eq.s32.totalorder %s17, 1
    %p98 = por %p96, %p97
    %p99 = scmp.ne.s32.totalorder %s90, %s91
    %p100 = scmp.eq.s32.totalorder %s17, 0
    %p101 = por %p99, %p100
    %p102 = scmp.ne.s32.totalorder %s90, %s91
    %p103 = scmp.eq.s32.totalorder %s18, 1
    %p104 = por %p102, %p103
    %p106 = scmp.ne.s32.totalorder %s91, %s105
    %p107 = scmp.eq.s32.totalorder %s18, 0
    %p108 = por %p106, %p107
    %s110 = sadd.s32 %s109, 1
    %p113 = scmp.eq.s32.totalorder %s12, 1
    %p114 = scmp.ne.s32.totalorder %s109, %s111
    %p115 = scmp.eq.s32.totalorder %s12, 0
    %p116 = por %p114, %p115
    %p117 = scmp.ne.s32.totalorder %s109, %s111
    %p118 = scmp.eq.s32.totalorder %s17, 1
    %p119 = por %p117, %p118
    %p120 = scmp.ne.s32.totalorder %s111, %s112
    %p121 = scmp.eq.s32.totalorder %s17, 0
    %p122 = por %p120, %p121
    %p123 = scmp.ne.s32.totalorder %s111, %s112
    %p124 = scmp.eq.s32.totalorder %s18, 1
    %p125 = por %p123, %p124
    %p127 = scmp.ne.s32.totalorder %s112, %s126
    %p128 = scmp.eq.s32.totalorder %s18, 0
    %p129 = por %p127, %p128
    %s131 = sadd.s32 %s130, 1
    %p134 = scmp.eq.s32.totalorder %s12, 1
    %p135 = scmp.ne.s32.totalorder %s130, %s132
    %p136 = scmp.eq.s32.totalorder %s12, 0
    %p137 = por %p135, %p136
    %p138 = scmp.ne.s32.totalorder %s130, %s132
    %p139 = scmp.eq.s32.totalorder %s17, 1
    %p140 = por %p138, %p139
    %p141 = scmp.ne.s32.totalorder %s132, %s133
    %p142 = scmp.eq.s32.totalorder %s17, 0
    %p143 = por %p141, %p142
    %p144 = scmp.ne.s32.totalorder %s132, %s133
    %p145 = scmp.eq.s32.totalorder %s18, 1
    %p146 = por %p144, %p145
    %p148 = scmp.ne.s32.totalorder %s133, %s147
    %p149 = scmp.eq.s32.totalorder %s18, 0
    %p150 = por %p148, %p149
    %s151 = ssub.s32 %s12, %s19
    %p152 = scmp.eq.s32.totalorder %s151, 0
    %s154 = sadd.s32 %s153, 1
    %s155 = scalar_select %p152, %s153, %s154
    %p158 = pneg %p152
    %p159 = scmp.eq.s32.totalorder %s12, 1
    %p160 = por %p158, %p159
    %p161 = scmp.ne.s32.totalorder %s153, %s156
    %p162 = scmp.eq.s32.totalorder %s12, 0
    %p163 = por %p161, %p162
    %p164 = scmp.ne.s32.totalorder %s153, %s156
    %p165 = scmp.eq.s32.totalorder %s17, 1
    %p166 = por %p164, %p165
    %p167 = scmp.ne.s32.totalorder %s156, %s157
    %p168 = scmp.eq.s32.totalorder %s17, 0
    %p169 = por %p167, %p168
    %p170 = scmp.ne.s32.totalorder %s156, %s157
    %p171 = scmp.eq.s32.totalorder %s18, 1
    %p172 = por %p170, %p171
    %p174 = scmp.ne.s32.totalorder %s157, %s173
    %p175 = scmp.eq.s32.totalorder %s18, 0
    %p176 = por %p174, %p175
    %p177 = scmp.le.s32.totalorder 1, %s12
    %p178 = scmp.lt.s32.totalorder %s12, 3
    %p179 = pnand %p177, %p178
    %p180 = pneg %p179
    // Predicated region
    $region9: #{_lambda_.2} parent=5 // pred_check
      _
    $region10: #{_lambda_.2} parent=5 // pred_check_branch
      %182 = sbr.rel (%p179) target = $region12
    $region11: #{_lambda_.2} parent=5 // pred_region
      %s183 = ssub.s32 %s12, 1
      // Predicated region
      $region13: #{_lambda_.2} parent=11 // pred_check
        %p184 = pneg %p59
      $region14: #{_lambda_.2} parent=11 // pred_check_branch
        %186 = sbr.rel (%p184) target = $region16
      $region15: #{_lambda_.2} parent=11 // pred_region
        _
      $region16: #{_lambda_.2} parent=11 // pred_fallthru
        _
      // Predicated region
      $region17: #{_lambda_.2} parent=11 // pred_check
        %p187 = pneg %p80
      $region18: #{_lambda_.2} parent=11 // pred_check_branch
        %189 = sbr.rel (%p187) target = $region20
      $region19: #{_lambda_.2} parent=11 // pred_region
        _
      $region20: #{_lambda_.2} parent=11 // pred_fallthru
        _
      // Predicated region
      $region21: #{_lambda_.2} parent=11 // pred_check
        %p190 = pneg %p101
      $region22: #{_lambda_.2} parent=11 // pred_check_branch
        %192 = sbr.rel (%p190) target = $region24
      $region23: #{_lambda_.2} parent=11 // pred_region
        _
      $region24: #{_lambda_.2} parent=11 // pred_fallthru
        _
      // Predicated region
      $region25: #{_lambda_.2} parent=11 // pred_check
        %p193 = pneg %p122
      $region26: #{_lambda_.2} parent=11 // pred_check_branch
        %195 = sbr.rel (%p193) target = $region28
      $region27: #{_lambda_.2} parent=11 // pred_region
        _
      $region28: #{_lambda_.2} parent=11 // pred_fallthru
        _
      // Predicated region
      $region29: #{_lambda_.2} parent=11 // pred_check
        %p196 = pneg %p143
      $region30: #{_lambda_.2} parent=11 // pred_check_branch
        %198 = sbr.rel (%p196) target = $region32
      $region31: #{_lambda_.2} parent=11 // pred_region
        _
      $region32: #{_lambda_.2} parent=11 // pred_fallthru
        _
    $region12: #{_lambda_.2} parent=5 // pred_fallthru
      _
    %p199 = scmp.lt.s32.totalorder %s12, 2
    // Predicated region
    $region33: #{_lambda_.2} parent=5 // pred_check
      %p200 = pneg %p199
    $region34: #{_lambda_.2} parent=5 // pred_check_branch
      %202 = sbr.rel (%p200) target = $region36
    $region35: #{_lambda_.2} parent=5 // pred_region
      // Predicated region
      $region37: #{_lambda_.2} parent=35 // pred_check
        %p203 = pneg %p32
      $region38: #{_lambda_.2} parent=35 // pred_check_branch
        %205 = sbr.rel (%p203) target = $region40
      $region39: #{_lambda_.2} parent=35 // pred_region
        %s206 = smul.u32 8, %s12
        %p207 = scmp.lt.s32.totalorder %s206, 15
        %s208 = scalar_select %p207, %s206, 15
        %s209 = smul.addr %s208, 4
        %s210 = smul.addr %s209, 4
        %s211 = scalar_lea.vmem %s0, %s210
        %s212 = smul.u32 8, %s12
      $region40: #{_lambda_.2} parent=35 // pred_fallthru
        _
    $region36: #{_lambda_.2} parent=5 // pred_fallthru
      _
    %p213 = scmp.le.s32.totalorder 1, %s12
    %p214 = scmp.lt.s32.totalorder %s12, 3
    %p215 = pnand %p213, %p214
    %p216 = pneg %p215
    // Predicated region
    $region41: #{_lambda_.2} parent=5 // pred_check
      _
    $region42: #{_lambda_.2} parent=5 // pred_check_branch
      %218 = sbr.rel (%p215) target = $region44
    $region43: #{_lambda_.2} parent=5 // pred_region
      %s219 = ssub.s32 %s12, 1
      %s220 = smul.u32 8, %s17
      %p221 = scmp.lt.s32.totalorder %s220, 15
      %s222 = scalar_select %p221, %s220, 15
      %s223 = smul.addr %s222, 4
      %s224 = smul.addr %s223, 4
      %s225 = scalar_lea.vmem %s0, %s224
      %p226 = pneg %p38
      %p227 = pneg %p35
      %p228 = pneg %p59
      %p229 = pneg %p56
      %p230 = pneg %p80
      %p231 = pneg %p77
      %p232 = pneg %p101
      %p233 = pneg %p98
      %p234 = pneg %p122
      %p235 = pneg %p119
      %p236 = pneg %p143
      %p237 = pneg %p140
      %p238 = pneg %p169
      %p239 = pneg %p166
      %s240 = smul.u32 8, %s17
      %p241 = scmp.lt.s32.totalorder %s240, 15
      %s242 = scalar_select %p241, %s240, 15
      %s243 = smul.addr %s242, 4
      %s244 = scalar_lea.vmem %s6, %s243
      %s245 = smul.u32 8, %s17
      %p246 = scmp.lt.s32.totalorder %s245, 15
      %s247 = scalar_select %p246, %s245, 15
      %s248 = smul.addr %s247, 4
      %s249 = smul.addr %s248, 4
      %s250 = scalar_lea.vmem %s0, %s249
      %s251 = smul.u32 8, %s17
      %s252 = smul.u32 8, %s17
      %p253 = scmp.lt.s32.totalorder %s252, 15
      %s254 = scalar_select %p253, %s252, 15
      %s255 = smul.addr %s254, 4
      %s256 = scalar_lea.vmem %s6, %s255
      %s257 = smul.u32 8, %s17
      %v259 = vld [vmem:[%s250] sm:$0xff]
      %v260 = vld [vmem:[%s250 + $0x8] sm:$0xff]
      %v261 = vld [vmem:[%s250 + $0x10] sm:$0xff]
      %v262 = vld [vmem:[%s250 + $0x18] sm:$0xff]
      %v263 = vld [vmem:[%s250 + $0x20] sm:$0xff]
      %v264 = vld [vmem:[%s250 + $0x28] sm:$0xff]
      %v265 = vld [vmem:[%s250 + $0x30] sm:$0xff]
      %v266 = vld [vmem:[%s250 + $0x38] sm:$0xff]
      %v267 = vld [vmem:[%s250 + $0x40] sm:$0xff]
      %v268 = vld [vmem:[%s250 + $0x48] sm:$0xff]
      %v269 = vld [vmem:[%s250 + $0x50] sm:$0xff]
      %v270 = vld [vmem:[%s250 + $0x58] sm:$0xff]
      %v271 = vld [vmem:[%s250 + $0x60] sm:$0xff]
      %v272 = vld [vmem:[%s250 + $0x68] sm:$0xff]
      %v273 = vld [vmem:[%s250 + $0x70] sm:$0xff]
      %v274 = vld [vmem:[%s250 + $0x78] sm:$0xff]
      %v275 = vld [vmem:[%s1] sm:$0xff]
      %v276 = vld [vmem:[%s1 + $0x8] sm:$0xff]
      %v277 = vld [vmem:[%s1 + $0x10] sm:$0xff]
      %v278 = vld [vmem:[%s1 + $0x18] sm:$0xff]
      %v279 = vld [vmem:[%s1 + $0x20] sm:$0xff]
      %v280 = vld [vmem:[%s1 + $0x28] sm:$0xff]
      %v281 = vld [vmem:[%s1 + $0x30] sm:$0xff]
      %v282 = vld [vmem:[%s1 + $0x38] sm:$0xff]
      %v283 = vld [vmem:[%s1 + $0x40] sm:$0xff]
      %v284 = vld [vmem:[%s1 + $0x48] sm:$0xff]
      %v285 = vld [vmem:[%s1 + $0x50] sm:$0xff]
      %v286 = vld [vmem:[%s1 + $0x58] sm:$0xff]
      %v287 = vld [vmem:[%s1 + $0x60] sm:$0xff]
      %v288 = vld [vmem:[%s1 + $0x68] sm:$0xff]
      %v289 = vld [vmem:[%s1 + $0x70] sm:$0xff]
      %v290 = vld [vmem:[%s1 + $0x78] sm:$0xff]
      %v291 = vld [vmem:[%s1 + $0x80] sm:$0xff]
      %v292 = vld [vmem:[%s1 + $0x88] sm:$0xff]
      %v293 = vld [vmem:[%s1 + $0x90] sm:$0xff]
      %v294 = vld [vmem:[%s1 + $0x98] sm:$0xff]
      %v295 = vld [vmem:[%s1 + $0xa0] sm:$0xff]
      %v296 = vld [vmem:[%s1 + $0xa8] sm:$0xff]
      %v297 = vld [vmem:[%s1 + $0xb0] sm:$0xff]
      %v298 = vld [vmem:[%s1 + $0xb8] sm:$0xff]
      %v299 = vld [vmem:[%s1 + $0xc0] sm:$0xff]
      %v300 = vld [vmem:[%s1 + $0xc8] sm:$0xff]
      %v301 = vld [vmem:[%s1 + $0xd0] sm:$0xff]
      %v302 = vld [vmem:[%s1 + $0xd8] sm:$0xff]
      %v303 = vld [vmem:[%s1 + $0xe0] sm:$0xff]
      %v304 = vld [vmem:[%s1 + $0xe8] sm:$0xff]
      %v305 = vld [vmem:[%s1 + $0xf0] sm:$0xff]
      %v306 = vld [vmem:[%s1 + $0xf8] sm:$0xff]
      %v307 = vld [vmem:[%s1 + $0x100] sm:$0xff]
      %v308 = vld [vmem:[%s1 + $0x108] sm:$0xff]
      %v309 = vld [vmem:[%s1 + $0x110] sm:$0xff]
      %v310 = vld [vmem:[%s1 + $0x118] sm:$0xff]
      %v311 = vld [vmem:[%s1 + $0x120] sm:$0xff]
      %v312 = vld [vmem:[%s1 + $0x128] sm:$0xff]
      %v313 = vld [vmem:[%s1 + $0x130] sm:$0xff]
      %v314 = vld [vmem:[%s1 + $0x138] sm:$0xff]
      %v315 = vld [vmem:[%s1 + $0x140] sm:$0xff]
      %v316 = vld [vmem:[%s1 + $0x148] sm:$0xff]
      %v317 = vld [vmem:[%s1 + $0x150] sm:$0xff]
      %v318 = vld [vmem:[%s1 + $0x158] sm:$0xff]
      %v319 = vld [vmem:[%s1 + $0x160] sm:$0xff]
      %v320 = vld [vmem:[%s1 + $0x168] sm:$0xff]
      %v321 = vld [vmem:[%s1 + $0x170] sm:$0xff]
      %v322 = vld [vmem:[%s1 + $0x178] sm:$0xff]
      %v323 = vld [vmem:[%s1 + $0x180] sm:$0xff]
      %v324 = vld [vmem:[%s1 + $0x188] sm:$0xff]
      %v325 = vld [vmem:[%s1 + $0x190] sm:$0xff]
      %v326 = vld [vmem:[%s1 + $0x198] sm:$0xff]
      %v327 = vld [vmem:[%s1 + $0x1a0] sm:$0xff]
      %v328 = vld [vmem:[%s1 + $0x1a8] sm:$0xff]
      %v329 = vld [vmem:[%s1 + $0x1b0] sm:$0xff]
      %v330 = vld [vmem:[%s1 + $0x1b8] sm:$0xff]
      %v331 = vld [vmem:[%s1 + $0x1c0] sm:$0xff]
      %v332 = vld [vmem:[%s1 + $0x1c8] sm:$0xff]
      %v333 = vld [vmem:[%s1 + $0x1d0] sm:$0xff]
      %v334 = vld [vmem:[%s1 + $0x1d8] sm:$0xff]
      %v335 = vld [vmem:[%s1 + $0x1e0] sm:$0xff]
      %v336 = vld [vmem:[%s1 + $0x1e8] sm:$0xff]
      %v337 = vld [vmem:[%s1 + $0x1f0] sm:$0xff]
      %v338 = vld [vmem:[%s1 + $0x1f8] sm:$0xff]
      %v339 = vld [vmem:[%s2] sm:$0x3]
      %v341 = vlaneseq
      %v342 = vshrl.u32 %v341, 7
      %v343 = vsub.s32 0, %v342
      %v344 = vrot.slane %v339, %v343
      %v345 = vlaneseq
      %v346 = vshrl.u32 %v345, 7
      %v347 = vsub.s32 1, %v346
      %v348 = vrot.slane %v339, %v347
      %v367 = vunpack.c.l.b16 %v259
      %v368 = vunpack.c.h.b16 %v259
      %v369 = vunpack.c.l.b16 %v260
      %v370 = vunpack.c.h.b16 %v260
      %v371 = vunpack.c.l.b16 %v261
      %v372 = vunpack.c.h.b16 %v261
      %v373 = vunpack.c.l.b16 %v262
      %v374 = vunpack.c.h.b16 %v262
      %v375 = vunpack.c.l.b16 %v263
      %v376 = vunpack.c.h.b16 %v263
      %v377 = vunpack.c.l.b16 %v264
      %v378 = vunpack.c.h.b16 %v264
      %v379 = vunpack.c.l.b16 %v265
      %v380 = vunpack.c.h.b16 %v265
      %v381 = vunpack.c.l.b16 %v266
      %v382 = vunpack.c.h.b16 %v266
      %v383 = vunpack.c.l.b16 %v267
      %v384 = vunpack.c.h.b16 %v267
      %v385 = vunpack.c.l.b16 %v268
      %v386 = vunpack.c.h.b16 %v268
      %v387 = vunpack.c.l.b16 %v269
      %v388 = vunpack.c.h.b16 %v269
      %v389 = vunpack.c.l.b16 %v270
      %v390 = vunpack.c.h.b16 %v270
      %v391 = vunpack.c.l.b16 %v271
      %v392 = vunpack.c.h.b16 %v271
      %v393 = vunpack.c.l.b16 %v272
      %v394 = vunpack.c.h.b16 %v272
      %v395 = vunpack.c.l.b16 %v273
      %v396 = vunpack.c.h.b16 %v273
      %v397 = vunpack.c.l.b16 %v274
      %v398 = vunpack.c.h.b16 %v274
      %v399 = vpack.c.b16 %v371, %v367
      %v400 = vpack.c.b16 %v372, %v368
      %v401 = vpack.c.b16 %v373, %v369
      %v402 = vpack.c.b16 %v374, %v370
      %v403 = vpack.c.b16 %v379, %v375
      %v404 = vpack.c.b16 %v380, %v376
      %v405 = vpack.c.b16 %v381, %v377
      %v406 = vpack.c.b16 %v382, %v378
      %v407 = vpack.c.b16 %v387, %v383
      %v408 = vpack.c.b16 %v388, %v384
      %v409 = vpack.c.b16 %v389, %v385
      %v410 = vpack.c.b16 %v390, %v386
      %v411 = vpack.c.b16 %v395, %v391
      %v412 = vpack.c.b16 %v396, %v392
      %v413 = vpack.c.b16 %v397, %v393
      %v414 = vpack.c.b16 %v398, %v394
      %v495 = vunpack.c.l.b16 %v275
      %v496 = vunpack.c.h.b16 %v275
      %v497 = vunpack.c.l.b16 %v276
      %v498 = vunpack.c.h.b16 %v276
      %v499 = vunpack.c.l.b16 %v277
      %v500 = vunpack.c.h.b16 %v277
      %v501 = vunpack.c.l.b16 %v278
      %v502 = vunpack.c.h.b16 %v278
      %v503 = vunpack.c.l.b16 %v279
      %v504 = vunpack.c.h.b16 %v279
      %v505 = vunpack.c.l.b16 %v280
      %v506 = vunpack.c.h.b16 %v280
      %v507 = vunpack.c.l.b16 %v281
      %v508 = vunpack.c.h.b16 %v281
      %v509 = vunpack.c.l.b16 %v282
      %v510 = vunpack.c.h.b16 %v282
      %v511 = vunpack.c.l.b16 %v283
      %v512 = vunpack.c.h.b16 %v283
      %v513 = vunpack.c.l.b16 %v284
      %v514 = vunpack.c.h.b16 %v284
      %v515 = vunpack.c.l.b16 %v285
      %v516 = vunpack.c.h.b16 %v285
      %v517 = vunpack.c.l.b16 %v286
      %v518 = vunpack.c.h.b16 %v286
      %v519 = vunpack.c.l.b16 %v287
      %v520 = vunpack.c.h.b16 %v287
      %v521 = vunpack.c.l.b16 %v288
      %v522 = vunpack.c.h.b16 %v288
      %v523 = vunpack.c.l.b16 %v289
      %v524 = vunpack.c.h.b16 %v289
      %v525 = vunpack.c.l.b16 %v290
      %v526 = vunpack.c.h.b16 %v290
      %v527 = vunpack.c.l.b16 %v291
      %v528 = vunpack.c.h.b16 %v291
      %v529 = vunpack.c.l.b16 %v292
      %v530 = vunpack.c.h.b16 %v292
      %v531 = vunpack.c.l.b16 %v293
      %v532 = vunpack.c.h.b16 %v293
      %v533 = vunpack.c.l.b16 %v294
      %v534 = vunpack.c.h.b16 %v294
      %v535 = vunpack.c.l.b16 %v295
      %v536 = vunpack.c.h.b16 %v295
      %v537 = vunpack.c.l.b16 %v296
      %v538 = vunpack.c.h.b16 %v296
      %v539 = vunpack.c.l.b16 %v297
      %v540 = vunpack.c.h.b16 %v297
      %v541 = vunpack.c.l.b16 %v298
      %v542 = vunpack.c.h.b16 %v298
      %v543 = vunpack.c.l.b16 %v299
      %v544 = vunpack.c.h.b16 %v299
      %v545 = vunpack.c.l.b16 %v300
      %v546 = vunpack.c.h.b16 %v300
      %v547 = vunpack.c.l.b16 %v301
      %v548 = vunpack.c.h.b16 %v301
      %v549 = vunpack.c.l.b16 %v302
      %v550 = vunpack.c.h.b16 %v302
      %v551 = vunpack.c.l.b16 %v303
      %v552 = vunpack.c.h.b16 %v303
      %v553 = vunpack.c.l.b16 %v304
      %v554 = vunpack.c.h.b16 %v304
      %v555 = vunpack.c.l.b16 %v305
      %v556 = vunpack.c.h.b16 %v305
      %v557 = vunpack.c.l.b16 %v306
      %v558 = vunpack.c.h.b16 %v306
      %v559 = vunpack.c.l.b16 %v307
      %v560 = vunpack.c.h.b16 %v307
      %v561 = vunpack.c.l.b16 %v308
      %v562 = vunpack.c.h.b16 %v308
      %v563 = vunpack.c.l.b16 %v309
      %v564 = vunpack.c.h.b16 %v309
      %v565 = vunpack.c.l.b16 %v310
      %v566 = vunpack.c.h.b16 %v310
      %v567 = vunpack.c.l.b16 %v311
      %v568 = vunpack.c.h.b16 %v311
      %v569 = vunpack.c.l.b16 %v312
      %v570 = vunpack.c.h.b16 %v312
      %v571 = vunpack.c.l.b16 %v313
      %v572 = vunpack.c.h.b16 %v313
      %v573 = vunpack.c.l.b16 %v314
      %v574 = vunpack.c.h.b16 %v314
      %v575 = vunpack.c.l.b16 %v315
      %v576 = vunpack.c.h.b16 %v315
      %v577 = vunpack.c.l.b16 %v316
      %v578 = vunpack.c.h.b16 %v316
      %v579 = vunpack.c.l.b16 %v317
      %v580 = vunpack.c.h.b16 %v317
      %v581 = vunpack.c.l.b16 %v318
      %v582 = vunpack.c.h.b16 %v318
      %v583 = vunpack.c.l.b16 %v319
      %v584 = vunpack.c.h.b16 %v319
      %v585 = vunpack.c.l.b16 %v320
      %v586 = vunpack.c.h.b16 %v320
      %v587 = vunpack.c.l.b16 %v321
      %v588 = vunpack.c.h.b16 %v321
      %v589 = vunpack.c.l.b16 %v322
      %v590 = vunpack.c.h.b16 %v322
      %v591 = vunpack.c.l.b16 %v323
      %v592 = vunpack.c.h.b16 %v323
      %v593 = vunpack.c.l.b16 %v324
      %v594 = vunpack.c.h.b16 %v324
      %v595 = vunpack.c.l.b16 %v325
      %v596 = vunpack.c.h.b16 %v325
      %v597 = vunpack.c.l.b16 %v326
      %v598 = vunpack.c.h.b16 %v326
      %v599 = vunpack.c.l.b16 %v327
      %v600 = vunpack.c.h.b16 %v327
      %v601 = vunpack.c.l.b16 %v328
      %v602 = vunpack.c.h.b16 %v328
      %v603 = vunpack.c.l.b16 %v329
      %v604 = vunpack.c.h.b16 %v329
      %v605 = vunpack.c.l.b16 %v330
      %v606 = vunpack.c.h.b16 %v330
      %v607 = vunpack.c.l.b16 %v331
      %v608 = vunpack.c.h.b16 %v331
      %v609 = vunpack.c.l.b16 %v332
      %v610 = vunpack.c.h.b16 %v332
      %v611 = vunpack.c.l.b16 %v333
      %v612 = vunpack.c.h.b16 %v333
      %v613 = vunpack.c.l.b16 %v334
      %v614 = vunpack.c.h.b16 %v334
      %v615 = vunpack.c.l.b16 %v335
      %v616 = vunpack.c.h.b16 %v335
      %v617 = vunpack.c.l.b16 %v336
      %v618 = vunpack.c.h.b16 %v336
      %v619 = vunpack.c.l.b16 %v337
      %v620 = vunpack.c.h.b16 %v337
      %v621 = vunpack.c.l.b16 %v338
      %v622 = vunpack.c.h.b16 %v338
      %v623 = vpack.c.b16 %v497, %v495
      %v624 = vpack.c.b16 %v498, %v496
      %v625 = vpack.c.b16 %v501, %v499
      %v626 = vpack.c.b16 %v502, %v500
      %v627 = vpack.c.b16 %v505, %v503
      %v628 = vpack.c.b16 %v506, %v504
      %v629 = vpack.c.b16 %v509, %v507
      %v630 = vpack.c.b16 %v510, %v508
      %v631 = vpack.c.b16 %v513, %v511
      %v632 = vpack.c.b16 %v514, %v512
      %v633 = vpack.c.b16 %v517, %v515
      %v634 = vpack.c.b16 %v518, %v516
      %v635 = vpack.c.b16 %v521, %v519
      %v636 = vpack.c.b16 %v522, %v520
      %v637 = vpack.c.b16 %v525, %v523
      %v638 = vpack.c.b16 %v526, %v524
      %v639 = vpack.c.b16 %v529, %v527
      %v640 = vpack.c.b16 %v530, %v528
      %v641 = vpack.c.b16 %v533, %v531
      %v642 = vpack.c.b16 %v534, %v532
      %v643 = vpack.c.b16 %v537, %v535
      %v644 = vpack.c.b16 %v538, %v536
      %v645 = vpack.c.b16 %v541, %v539
      %v646 = vpack.c.b16 %v542, %v540
      %v647 = vpack.c.b16 %v545, %v543
      %v648 = vpack.c.b16 %v546, %v544
      %v649 = vpack.c.b16 %v549, %v547
      %v650 = vpack.c.b16 %v550, %v548
      %v651 = vpack.c.b16 %v553, %v551
      %v652 = vpack.c.b16 %v554, %v552
      %v653 = vpack.c.b16 %v557, %v555
      %v654 = vpack.c.b16 %v558, %v556
      %v655 = vpack.c.b16 %v561, %v559
      %v656 = vpack.c.b16 %v562, %v560
      %v657 = vpack.c.b16 %v565, %v563
      %v658 = vpack.c.b16 %v566, %v564
      %v659 = vpack.c.b16 %v569, %v567
      %v660 = vpack.c.b16 %v570, %v568
      %v661 = vpack.c.b16 %v573, %v571
      %v662 = vpack.c.b16 %v574, %v572
      %v663 = vpack.c.b16 %v577, %v575
      %v664 = vpack.c.b16 %v578, %v576
      %v665 = vpack.c.b16 %v581, %v579
      %v666 = vpack.c.b16 %v582, %v580
      %v667 = vpack.c.b16 %v585, %v583
      %v668 = vpack.c.b16 %v586, %v584
      %v669 = vpack.c.b16 %v589, %v587
      %v670 = vpack.c.b16 %v590, %v588
      %v671 = vpack.c.b16 %v593, %v591
      %v672 = vpack.c.b16 %v594, %v592
      %v673 = vpack.c.b16 %v597, %v595
      %v674 = vpack.c.b16 %v598, %v596
      %v675 = vpack.c.b16 %v601, %v599
      %v676 = vpack.c.b16 %v602, %v600
      %v677 = vpack.c.b16 %v605, %v603
      %v678 = vpack.c.b16 %v606, %v604
      %v679 = vpack.c.b16 %v609, %v607
      %v680 = vpack.c.b16 %v610, %v608
      %v681 = vpack.c.b16 %v613, %v611
      %v682 = vpack.c.b16 %v614, %v612
      %v683 = vpack.c.b16 %v617, %v615
      %v684 = vpack.c.b16 %v618, %v616
      %v685 = vpack.c.b16 %v621, %v619
      %v686 = vpack.c.b16 %v622, %v620
      %751 = vmatprep.subr.bf16.mxu0 %v638
      %752 = vmatpush1.bf16.msra.mxu0 %v637
      %753 = vmatprep.subr.bf16.mxu0 %v636
      %754 = vmatpush1.bf16.msra.mxu0 %v635
      %755 = vmatprep.subr.bf16.mxu0 %v634
      %756 = vmatpush1.bf16.msra.mxu0 %v633
      %757 = vmatprep.subr.bf16.mxu0 %v632
      %758 = vmatpush1.bf16.msra.mxu0 %v631
      %759 = vmatprep.subr.bf16.mxu0 %v630
      %760 = vmatpush1.bf16.msra.mxu0 %v629
      %761 = vmatprep.subr.bf16.mxu0 %v628
      %762 = vmatpush1.bf16.msra.mxu0 %v627
      %763 = vmatprep.subr.bf16.mxu0 %v626
      %764 = vmatpush1.bf16.msra.mxu0 %v625
      %765 = vmatprep.subr.bf16.mxu0 %v624
      %766 = vmatpush1.bf16.msra.mxu0 %v623
      %767 = vmatprep.subr.bf16.mxu0 %v654
      %768 = vmatpush2.bf16.msra.mxu0 %v653
      %769 = vmatprep.subr.bf16.mxu0 %v652
      %770 = vmatpush2.bf16.msra.mxu0 %v651
      %771 = vmatprep.subr.bf16.mxu0 %v650
      %772 = vmatpush2.bf16.msra.mxu0 %v649
      %773 = vmatprep.subr.bf16.mxu0 %v648
      %774 = vmatpush2.bf16.msra.mxu0 %v647
      %775 = vmatprep.subr.bf16.mxu0 %v646
      %776 = vmatpush2.bf16.msra.mxu0 %v645
      %777 = vmatprep.subr.bf16.mxu0 %v644
      %778 = vmatpush2.bf16.msra.mxu0 %v643
      %779 = vmatprep.subr.bf16.mxu0 %v642
      %780 = vmatpush2.bf16.msra.mxu0 %v641
      %781 = vmatprep.subr.bf16.mxu0 %v640
      %782 = vmatpush2.bf16.msra.mxu0 %v639
      %783 = vmatprep.mubr.bf16.mxu0 %v400
      %784 = vmatmul.mubr.bf16.gmra.mxu0 %v399
      %v785 = vpop.f32.mrf.mxu0
      %v786 = vadd.f32 %v344, %v785
      %v787 = vpop.f32.mrf.mxu0
      %v788 = vadd.f32 %v348, %v787
      %v789 = vpop.f32.mrf.mxu0
      %v790 = vadd.f32 %v344, %v789
      %v791 = vpop.f32.mrf.mxu0
      %v792 = vadd.f32 %v348, %v791
      %793 = vmatprep.mubr.bf16.mxu0 %v404
      %794 = vmatmul.mubr.bf16.gmra.mxu0 %v403
      %v795 = vpop.f32.mrf.mxu0
      %v796 = vadd.f32 %v344, %v795
      %v797 = vpop.f32.mrf.mxu0
      %v798 = vadd.f32 %v348, %v797
      %v799 = vpop.f32.mrf.mxu0
      %v800 = vadd.f32 %v344, %v799
      %v801 = vpop.f32.mrf.mxu0
      %v802 = vadd.f32 %v348, %v801
      %803 = vmatprep.mubr.bf16.mxu0 %v408
      %804 = vmatmul.mubr.bf16.gmra.mxu0 %v407
      %v805 = vpop.f32.mrf.mxu0
      %v806 = vadd.f32 %v344, %v805
      %v807 = vpop.f32.mrf.mxu0
      %v808 = vadd.f32 %v348, %v807
      %v809 = vpop.f32.mrf.mxu0
      %v810 = vadd.f32 %v344, %v809
      %v811 = vpop.f32.mrf.mxu0
      %v812 = vadd.f32 %v348, %v811
      %813 = vmatprep.mubr.bf16.mxu0 %v412
      %814 = vmatmul.mubr.bf16.gmra.mxu0 %v411
      %v815 = vpop.f32.mrf.mxu0
      %v816 = vadd.f32 %v344, %v815
      %v817 = vpop.f32.mrf.mxu0
      %v818 = vadd.f32 %v348, %v817
      %v819 = vpop.f32.mrf.mxu0
      %v820 = vadd.f32 %v344, %v819
      %v821 = vpop.f32.mrf.mxu0
      %v822 = vadd.f32 %v348, %v821
      %823 = vdwg.mxu0
      %824 = vmatprep.subr.bf16.mxu0 %v670
      %825 = vmatpush1.bf16.msra.mxu0 %v669
      %826 = vmatprep.subr.bf16.mxu0 %v668
      %827 = vmatpush1.bf16.msra.mxu0 %v667
      %828 = vmatprep.subr.bf16.mxu0 %v666
      %829 = vmatpush1.bf16.msra.mxu0 %v665
      %830 = vmatprep.subr.bf16.mxu0 %v664
      %831 = vmatpush1.bf16.msra.mxu0 %v663
      %832 = vmatprep.subr.bf16.mxu0 %v662
      %833 = vmatpush1.bf16.msra.mxu0 %v661
      %834 = vmatprep.subr.bf16.mxu0 %v660
      %835 = vmatpush1.bf16.msra.mxu0 %v659
      %836 = vmatprep.subr.bf16.mxu0 %v658
      %837 = vmatpush1.bf16.msra.mxu0 %v657
      %838 = vmatprep.subr.bf16.mxu0 %v656
      %839 = vmatpush1.bf16.msra.mxu0 %v655
      %840 = vmatprep.subr.bf16.mxu0 %v686
      %841 = vmatpush2.bf16.msra.mxu0 %v685
      %842 = vmatprep.subr.bf16.mxu0 %v684
      %843 = vmatpush2.bf16.msra.mxu0 %v683
      %844 = vmatprep.subr.bf16.mxu0 %v682
      %845 = vmatpush2.bf16.msra.mxu0 %v681
      %846 = vmatprep.subr.bf16.mxu0 %v680
      %847 = vmatpush2.bf16.msra.mxu0 %v679
      %848 = vmatprep.subr.bf16.mxu0 %v678
      %849 = vmatpush2.bf16.msra.mxu0 %v677
      %850 = vmatprep.subr.bf16.mxu0 %v676
      %851 = vmatpush2.bf16.msra.mxu0 %v675
      %852 = vmatprep.subr.bf16.mxu0 %v674
      %853 = vmatpush2.bf16.msra.mxu0 %v673
      %854 = vmatprep.subr.bf16.mxu0 %v672
      %855 = vmatpush2.bf16.msra.mxu0 %v671
      %856 = vmatprep.mubr.bf16.mxu0 %v402
      %857 = vmatmul.mubr.bf16.gmra.mxu0 %v401
      %v858 = vpop.f32.mrf.mxu0
      %v859 = vadd.f32 %v786, %v858
      %v860 = vpop.f32.mrf.mxu0
      %v861 = vadd.f32 %v788, %v860
      %v862 = vpop.f32.mrf.mxu0
      %v863 = vadd.f32 %v790, %v862
      %v864 = vpop.f32.mrf.mxu0
      %v865 = vadd.f32 %v792, %v864
      %866 = vmatprep.mubr.bf16.mxu0 %v406
      %867 = vmatmul.mubr.bf16.gmra.mxu0 %v405
      %v868 = vpop.f32.mrf.mxu0
      %v869 = vadd.f32 %v796, %v868
      %v870 = vpop.f32.mrf.mxu0
      %v871 = vadd.f32 %v798, %v870
      %v872 = vpop.f32.mrf.mxu0
      %v873 = vadd.f32 %v800, %v872
      %v874 = vpop.f32.mrf.mxu0
      %v875 = vadd.f32 %v802, %v874
      %876 = vmatprep.mubr.bf16.mxu0 %v410
      %877 = vmatmul.mubr.bf16.gmra.mxu0 %v409
      %v878 = vpop.f32.mrf.mxu0
      %v879 = vadd.f32 %v806, %v878
      %v880 = vpop.f32.mrf.mxu0
      %v881 = vadd.f32 %v808, %v880
      %v882 = vpop.f32.mrf.mxu0
      %v883 = vadd.f32 %v810, %v882
      %v884 = vpop.f32.mrf.mxu0
      %v885 = vadd.f32 %v812, %v884
      %886 = vmatprep.mubr.bf16.mxu0 %v414
      %887 = vmatmul.mubr.bf16.gmra.mxu0 %v413
      %v888 = vpop.f32.mrf.mxu0
      %v889 = vadd.f32 %v816, %v888
      %v890 = vpop.f32.mrf.mxu0
      %v891 = vadd.f32 %v818, %v890
      %v892 = vpop.f32.mrf.mxu0
      %v893 = vadd.f32 %v820, %v892
      %v894 = vpop.f32.mrf.mxu0
      %v895 = vadd.f32 %v822, %v894
      %896 = vdwg.mxu0
      %v897 = vmul.f32 %v859, 0.5
      %v898 = vmul.f32 %v861, 0.5
      %v899 = vmul.f32 %v863, 0.5
      %v900 = vmul.f32 %v865, 0.5
      %v901 = vmul.f32 %v869, 0.5
      %v902 = vmul.f32 %v871, 0.5
      %v903 = vmul.f32 %v873, 0.5
      %v904 = vmul.f32 %v875, 0.5
      %v905 = vmul.f32 %v879, 0.5
      %v906 = vmul.f32 %v881, 0.5
      %v907 = vmul.f32 %v883, 0.5
      %v908 = vmul.f32 %v885, 0.5
      %v909 = vmul.f32 %v889, 0.5
      %v910 = vmul.f32 %v891, 0.5
      %v911 = vmul.f32 %v893, 0.5
      %v912 = vmul.f32 %v895, 0.5
      %v913 = vmul.f32 %v859, 0.044715
      %v914 = vmul.f32 %v861, 0.044715
      %v915 = vmul.f32 %v863, 0.044715
      %v916 = vmul.f32 %v865, 0.044715
      %v917 = vmul.f32 %v869, 0.044715
      %v918 = vmul.f32 %v871, 0.044715
      %v919 = vmul.f32 %v873, 0.044715
      %v920 = vmul.f32 %v875, 0.044715
      %v921 = vmul.f32 %v879, 0.044715
      %v922 = vmul.f32 %v881, 0.044715
      %v923 = vmul.f32 %v883, 0.044715
      %v924 = vmul.f32 %v885, 0.044715
      %v925 = vmul.f32 %v889, 0.044715
      %v926 = vmul.f32 %v891, 0.044715
      %v927 = vmul.f32 %v893, 0.044715
      %v928 = vmul.f32 %v895, 0.044715
      %v929 = vmul.f32 %v913, %v859
      %v930 = vmul.f32 %v914, %v861
      %v931 = vmul.f32 %v915, %v863
      %v932 = vmul.f32 %v916, %v865
      %v933 = vmul.f32 %v917, %v869
      %v934 = vmul.f32 %v918, %v871
      %v935 = vmul.f32 %v919, %v873
      %v936 = vmul.f32 %v920, %v875
      %v937 = vmul.f32 %v921, %v879
      %v938 = vmul.f32 %v922, %v881
      %v939 = vmul.f32 %v923, %v883
      %v940 = vmul.f32 %v924, %v885
      %v941 = vmul.f32 %v925, %v889
      %v942 = vmul.f32 %v926, %v891
      %v943 = vmul.f32 %v927, %v893
      %v944 = vmul.f32 %v928, %v895
      %v945 = vmul.f32 %v929, %v859
      %v946 = vmul.f32 %v930, %v861
      %v947 = vmul.f32 %v931, %v863
      %v948 = vmul.f32 %v932, %v865
      %v949 = vmul.f32 %v933, %v869
      %v950 = vmul.f32 %v934, %v871
      %v951 = vmul.f32 %v935, %v873
      %v952 = vmul.f32 %v936, %v875
      %v953 = vmul.f32 %v937, %v879
      %v954 = vmul.f32 %v938, %v881
      %v955 = vmul.f32 %v939, %v883
      %v956 = vmul.f32 %v940, %v885
      %v957 = vmul.f32 %v941, %v889
      %v958 = vmul.f32 %v942, %v891
      %v959 = vmul.f32 %v943, %v893
      %v960 = vmul.f32 %v944, %v895
      %v961 = vadd.f32 %v859, %v945
      %v962 = vadd.f32 %v861, %v946
      %v963 = vadd.f32 %v863, %v947
      %v964 = vadd.f32 %v865, %v948
      %v965 = vadd.f32 %v869, %v949
      %v966 = vadd.f32 %v871, %v950
      %v967 = vadd.f32 %v873, %v951
      %v968 = vadd.f32 %v875, %v952
      %v969 = vadd.f32 %v879, %v953
      %v970 = vadd.f32 %v881, %v954
      %v971 = vadd.f32 %v883, %v955
      %v972 = vadd.f32 %v885, %v956
      %v973 = vadd.f32 %v889, %v957
      %v974 = vadd.f32 %v891, %v958
      %v975 = vadd.f32 %v893, %v959
      %v976 = vadd.f32 %v895, %v960
      %v977 = vmul.f32 %v961, 0.7978846
      %v978 = vmul.f32 %v962, 0.7978846
      %v979 = vmul.f32 %v963, 0.7978846
      %v980 = vmul.f32 %v964, 0.7978846
      %v981 = vmul.f32 %v965, 0.7978846
      %v982 = vmul.f32 %v966, 0.7978846
      %v983 = vmul.f32 %v967, 0.7978846
      %v984 = vmul.f32 %v968, 0.7978846
      %v985 = vmul.f32 %v969, 0.7978846
      %v986 = vmul.f32 %v970, 0.7978846
      %v987 = vmul.f32 %v971, 0.7978846
      %v988 = vmul.f32 %v972, 0.7978846
      %v989 = vmul.f32 %v973, 0.7978846
      %v990 = vmul.f32 %v974, 0.7978846
      %v991 = vmul.f32 %v975, 0.7978846
      %v992 = vmul.f32 %v976, 0.7978846
      %v993 = vtanh.pop %v977
      %v994 = vtanh.pop %v978
      %v995 = vtanh.pop %v979
      %v996 = vtanh.pop %v980
      %v997 = vtanh.pop %v981
      %v998 = vtanh.pop %v982
      %v999 = vtanh.pop %v983
      %v1000 = vtanh.pop %v984
      %v1001 = vtanh.pop %v985
      %v1002 = vtanh.pop %v986
      %v1003 = vtanh.pop %v987
      %v1004 = vtanh.pop %v988
      %v1005 = vtanh.pop %v989
      %v1006 = vtanh.pop %v990
      %v1007 = vtanh.pop %v991
      %v1008 = vtanh.pop %v992
      %v1009 = vadd.f32 %v993, 1.0
      %v1010 = vadd.f32 %v994, 1.0
      %v1011 = vadd.f32 %v995, 1.0
      %v1012 = vadd.f32 %v996, 1.0
      %v1013 = vadd.f32 %v997, 1.0
      %v1014 = vadd.f32 %v998, 1.0
      %v1015 = vadd.f32 %v999, 1.0
      %v1016 = vadd.f32 %v1000, 1.0
      %v1017 = vadd.f32 %v1001, 1.0
      %v1018 = vadd.f32 %v1002, 1.0
      %v1019 = vadd.f32 %v1003, 1.0
      %v1020 = vadd.f32 %v1004, 1.0
      %v1021 = vadd.f32 %v1005, 1.0
      %v1022 = vadd.f32 %v1006, 1.0
      %v1023 = vadd.f32 %v1007, 1.0
      %v1024 = vadd.f32 %v1008, 1.0
      %v1025 = vmul.f32 %v897, %v1009
      %v1026 = vmul.f32 %v898, %v1010
      %v1027 = vmul.f32 %v899, %v1011
      %v1028 = vmul.f32 %v900, %v1012
      %v1029 = vmul.f32 %v901, %v1013
      %v1030 = vmul.f32 %v902, %v1014
      %v1031 = vmul.f32 %v903, %v1015
      %v1032 = vmul.f32 %v904, %v1016
      %v1033 = vmul.f32 %v905, %v1017
      %v1034 = vmul.f32 %v906, %v1018
      %v1035 = vmul.f32 %v907, %v1019
      %v1036 = vmul.f32 %v908, %v1020
      %v1037 = vmul.f32 %v909, %v1021
      %v1038 = vmul.f32 %v910, %v1022
      %v1039 = vmul.f32 %v911, %v1023
      %v1040 = vmul.f32 %v912, %v1024
      %v1041 = vpack.c.bf16 %v1027, %v1025
      %v1042 = vpack.c.bf16 %v1028, %v1026
      %v1043 = vpack.c.bf16 %v1031, %v1029
      %v1044 = vpack.c.bf16 %v1032, %v1030
      %v1045 = vpack.c.bf16 %v1035, %v1033
      %v1046 = vpack.c.bf16 %v1036, %v1034
      %v1047 = vpack.c.bf16 %v1039, %v1037
      %v1048 = vpack.c.bf16 %v1040, %v1038
      %v1049 = vld [vmem:[%s3] sm:$0xf]
      %v1050 = vld [vmem:[%s3 + $0x4] sm:$0xf]
      %v1051 = vld [vmem:[%s3 + $0x8] sm:$0xf]
      %v1052 = vld [vmem:[%s3 + $0xc] sm:$0xf]
      %v1053 = vld [vmem:[%s3 + $0x10] sm:$0xf]
      %v1054 = vld [vmem:[%s3 + $0x14] sm:$0xf]
      %v1055 = vld [vmem:[%s3 + $0x18] sm:$0xf]
      %v1056 = vld [vmem:[%s3 + $0x1c] sm:$0xf]
      %v1057 = vld [vmem:[%s3 + $0x20] sm:$0xf]
      %v1058 = vld [vmem:[%s3 + $0x24] sm:$0xf]
      %v1059 = vld [vmem:[%s3 + $0x28] sm:$0xf]
      %v1060 = vld [vmem:[%s3 + $0x2c] sm:$0xf]
      %v1061 = vld [vmem:[%s3 + $0x30] sm:$0xf]
      %v1062 = vld [vmem:[%s3 + $0x34] sm:$0xf]
      %v1063 = vld [vmem:[%s3 + $0x38] sm:$0xf]
      %v1064 = vld [vmem:[%s3 + $0x3c] sm:$0xf]
      %v1065 = vld [vmem:[%s3 + $0x40] sm:$0xf]
      %v1066 = vld [vmem:[%s3 + $0x44] sm:$0xf]
      %v1067 = vld [vmem:[%s3 + $0x48] sm:$0xf]
      %v1068 = vld [vmem:[%s3 + $0x4c] sm:$0xf]
      %v1069 = vld [vmem:[%s3 + $0x50] sm:$0xf]
      %v1070 = vld [vmem:[%s3 + $0x54] sm:$0xf]
      %v1071 = vld [vmem:[%s3 + $0x58] sm:$0xf]
      %v1072 = vld [vmem:[%s3 + $0x5c] sm:$0xf]
      %v1073 = vld [vmem:[%s3 + $0x60] sm:$0xf]
      %v1074 = vld [vmem:[%s3 + $0x64] sm:$0xf]
      %v1075 = vld [vmem:[%s3 + $0x68] sm:$0xf]
      %v1076 = vld [vmem:[%s3 + $0x6c] sm:$0xf]
      %v1077 = vld [vmem:[%s3 + $0x70] sm:$0xf]
      %v1078 = vld [vmem:[%s3 + $0x74] sm:$0xf]
      %v1079 = vld [vmem:[%s3 + $0x78] sm:$0xf]
      %v1080 = vld [vmem:[%s3 + $0x7c] sm:$0xf]
      %v1081 = vld [vmem:[%s4] sm:$0x1]
      %v1083 = vlaneseq
      %v1084 = vshrl.u32 %v1083, 7
      %v1085 = vsub.s32 0, %v1084
      %v1086 = vrot.slane %v1081, %v1085
      %v1120 = vunpack.c.l.b16 %v1049
      %v1121 = vunpack.c.l.b16 %v1050
      %v1122 = vunpack.c.l.b16 %v1051
      %v1123 = vunpack.c.l.b16 %v1052
      %v1124 = vunpack.c.l.b16 %v1053
      %v1125 = vunpack.c.l.b16 %v1054
      %v1126 = vunpack.c.l.b16 %v1055
      %v1127 = vunpack.c.l.b16 %v1056
      %v1128 = vunpack.c.l.b16 %v1057
      %v1129 = vunpack.c.l.b16 %v1058
      %v1130 = vunpack.c.l.b16 %v1059
      %v1131 = vunpack.c.l.b16 %v1060
      %v1132 = vunpack.c.l.b16 %v1061
      %v1133 = vunpack.c.l.b16 %v1062
      %v1134 = vunpack.c.l.b16 %v1063
      %v1135 = vunpack.c.l.b16 %v1064
      %v1136 = vunpack.c.l.b16 %v1065
      %v1137 = vunpack.c.l.b16 %v1066
      %v1138 = vunpack.c.l.b16 %v1067
      %v1139 = vunpack.c.l.b16 %v1068
      %v1140 = vunpack.c.l.b16 %v1069
      %v1141 = vunpack.c.l.b16 %v1070
      %v1142 = vunpack.c.l.b16 %v1071
      %v1143 = vunpack.c.l.b16 %v1072
      %v1144 = vunpack.c.l.b16 %v1073
      %v1145 = vunpack.c.l.b16 %v1074
      %v1146 = vunpack.c.l.b16 %v1075
      %v1147 = vunpack.c.l.b16 %v1076
      %v1148 = vunpack.c.l.b16 %v1077
      %v1149 = vunpack.c.l.b16 %v1078
      %v1150 = vunpack.c.l.b16 %v1079
      %v1151 = vunpack.c.l.b16 %v1080
      %v1152 = vpack.c.b16 %v1121, %v1120
      %v1153 = vpack.c.b16 %v1123, %v1122
      %v1154 = vpack.c.b16 %v1125, %v1124
      %v1155 = vpack.c.b16 %v1127, %v1126
      %v1156 = vpack.c.b16 %v1129, %v1128
      %v1157 = vpack.c.b16 %v1131, %v1130
      %v1158 = vpack.c.b16 %v1133, %v1132
      %v1159 = vpack.c.b16 %v1135, %v1134
      %v1160 = vpack.c.b16 %v1137, %v1136
      %v1161 = vpack.c.b16 %v1139, %v1138
      %v1162 = vpack.c.b16 %v1141, %v1140
      %v1163 = vpack.c.b16 %v1143, %v1142
      %v1164 = vpack.c.b16 %v1145, %v1144
      %v1165 = vpack.c.b16 %v1147, %v1146
      %v1166 = vpack.c.b16 %v1149, %v1148
      %v1167 = vpack.c.b16 %v1151, %v1150
      %1184 = vmatprep.subr.bf16.mxu0 0
      %1185 = vmatpush1.bf16.msra.mxu0 %v1159
      %1186 = vmatprep.subr.bf16.mxu0 0
      %1187 = vmatpush1.bf16.msra.mxu0 %v1158
      %1188 = vmatprep.subr.bf16.mxu0 0
      %1189 = vmatpush1.bf16.msra.mxu0 %v1157
      %1190 = vmatprep.subr.bf16.mxu0 0
      %1191 = vmatpush1.bf16.msra.mxu0 %v1156
      %1192 = vmatprep.subr.bf16.mxu0 0
      %1193 = vmatpush1.bf16.msra.mxu0 %v1155
      %1194 = vmatprep.subr.bf16.mxu0 0
      %1195 = vmatpush1.bf16.msra.mxu0 %v1154
      %1196 = vmatprep.subr.bf16.mxu0 0
      %1197 = vmatpush1.bf16.msra.mxu0 %v1153
      %1198 = vmatprep.subr.bf16.mxu0 0
      %1199 = vmatpush1.bf16.msra.mxu0 %v1152
      %1200 = vmatprep.subr.bf16.mxu0 0
      %1201 = vmatpush2.bf16.msra.mxu0 %v1167
      %1202 = vmatprep.subr.bf16.mxu0 0
      %1203 = vmatpush2.bf16.msra.mxu0 %v1166
      %1204 = vmatprep.subr.bf16.mxu0 0
      %1205 = vmatpush2.bf16.msra.mxu0 %v1165
      %1206 = vmatprep.subr.bf16.mxu0 0
      %1207 = vmatpush2.bf16.msra.mxu0 %v1164
      %1208 = vmatprep.subr.bf16.mxu0 0
      %1209 = vmatpush2.bf16.msra.mxu0 %v1163
      %1210 = vmatprep.subr.bf16.mxu0 0
      %1211 = vmatpush2.bf16.msra.mxu0 %v1162
      %1212 = vmatprep.subr.bf16.mxu0 0
      %1213 = vmatpush2.bf16.msra.mxu0 %v1161
      %1214 = vmatprep.subr.bf16.mxu0 0
      %1215 = vmatpush2.bf16.msra.mxu0 %v1160
      %1216 = vmatprep.mubr.bf16.mxu0 %v1042
      %1217 = vmatmul.mubr.bf16.gmra.mxu0 %v1041
      %v1218 = vpop.f32.mrf.mxu0
      %v1219 = vadd.f32 %v1086, %v1218
      %v1220 = vpop.f32.mrf.mxu0
      %v1221 = vpop.f32.mrf.mxu0
      %v1222 = vadd.f32 %v1086, %v1221
      %v1223 = vpop.f32.mrf.mxu0
      %1224 = vmatprep.mubr.bf16.mxu0 %v1044
      %1225 = vmatmul.mubr.bf16.gmra.mxu0 %v1043
      %v1226 = vpop.f32.mrf.mxu0
      %v1227 = vadd.f32 %v1086, %v1226
      %v1228 = vpop.f32.mrf.mxu0
      %v1229 = vpop.f32.mrf.mxu0
      %v1230 = vadd.f32 %v1086, %v1229
      %v1231 = vpop.f32.mrf.mxu0
      %1232 = vmatprep.mubr.bf16.mxu0 %v1046
      %1233 = vmatmul.mubr.bf16.gmra.mxu0 %v1045
      %v1234 = vpop.f32.mrf.mxu0
      %v1235 = vadd.f32 %v1086, %v1234
      %v1236 = vpop.f32.mrf.mxu0
      %v1237 = vpop.f32.mrf.mxu0
      %v1238 = vadd.f32 %v1086, %v1237
      %v1239 = vpop.f32.mrf.mxu0
      %1240 = vmatprep.mubr.bf16.mxu0 %v1048
      %1241 = vmatmul.mubr.bf16.gmra.mxu0 %v1047
      %v1242 = vpop.f32.mrf.mxu0
      %v1243 = vadd.f32 %v1086, %v1242
      %v1244 = vpop.f32.mrf.mxu0
      %v1245 = vpop.f32.mrf.mxu0
      %v1246 = vadd.f32 %v1086, %v1245
      %v1247 = vpop.f32.mrf.mxu0
      %1248 = vdwg.mxu0
      %v1249 = vmax.f32 %v1219, 0.0
      %v1250 = vmax.f32 %v1222, 0.0
      %v1251 = vmax.f32 %v1227, 0.0
      %v1252 = vmax.f32 %v1230, 0.0
      %v1253 = vmax.f32 %v1235, 0.0
      %v1254 = vmax.f32 %v1238, 0.0
      %v1255 = vmax.f32 %v1243, 0.0
      %v1256 = vmax.f32 %v1246, 0.0
      %v1257 = vmin.f32 %v1249, 1.0
      %v1258 = vmin.f32 %v1250, 1.0
      %v1259 = vmin.f32 %v1251, 1.0
      %v1260 = vmin.f32 %v1252, 1.0
      %v1261 = vmin.f32 %v1253, 1.0
      %v1262 = vmin.f32 %v1254, 1.0
      %v1263 = vmin.f32 %v1255, 1.0
      %v1264 = vmin.f32 %v1256, 1.0
      %v1265 = vmul.f32 %v1257, 3.0
      %v1266 = vmul.f32 %v1258, 3.0
      %v1267 = vmul.f32 %v1259, 3.0
      %v1268 = vmul.f32 %v1260, 3.0
      %v1269 = vmul.f32 %v1261, 3.0
      %v1270 = vmul.f32 %v1262, 3.0
      %v1271 = vmul.f32 %v1263, 3.0
      %v1272 = vmul.f32 %v1264, 3.0
      %v1273 = vround.ne.pseudo %v1265
      %v1274 = vround.ne.pseudo %v1266
      %v1275 = vround.ne.pseudo %v1267
      %v1276 = vround.ne.pseudo %v1268
      %v1277 = vround.ne.pseudo %v1269
      %v1278 = vround.ne.pseudo %v1270
      %v1279 = vround.ne.pseudo %v1271
      %v1280 = vround.ne.pseudo %v1272
      %v1281 = vrcp.pop 3.0
      %v1282 = vmul.f32 %v1273, %v1281
      %v1283 = vmul.f32 %v1274, %v1281
      %v1284 = vmul.f32 %v1275, %v1281
      %v1285 = vmul.f32 %v1276, %v1281
      %v1286 = vmul.f32 %v1277, %v1281
      %v1287 = vmul.f32 %v1278, %v1281
      %v1288 = vmul.f32 %v1279, %v1281
      %v1289 = vmul.f32 %v1280, %v1281
      %v1290 = vld [vmem:[%s5] sm:$0xf]
      %v1291 = vld [vmem:[%s5 + $0x4] sm:$0xf]
      %v1292 = vld [vmem:[%s5 + $0x8] sm:$0xf]
      %v1293 = vld [vmem:[%s5 + $0xc] sm:$0xf]
      %v1294 = vld [vmem:[%s5 + $0x10] sm:$0xf]
      %v1295 = vld [vmem:[%s5 + $0x14] sm:$0xf]
      %v1296 = vld [vmem:[%s5 + $0x18] sm:$0xf]
      %v1297 = vld [vmem:[%s5 + $0x1c] sm:$0xf]
      %v1298 = vld [vmem:[%s5 + $0x20] sm:$0xf]
      %v1299 = vld [vmem:[%s5 + $0x24] sm:$0xf]
      %v1300 = vld [vmem:[%s5 + $0x28] sm:$0xf]
      %v1301 = vld [vmem:[%s5 + $0x2c] sm:$0xf]
      %v1302 = vld [vmem:[%s5 + $0x30] sm:$0xf]
      %v1303 = vld [vmem:[%s5 + $0x34] sm:$0xf]
      %v1304 = vld [vmem:[%s5 + $0x38] sm:$0xf]
      %v1305 = vld [vmem:[%s5 + $0x3c] sm:$0xf]
      %v1306 = vld [vmem:[%s5 + $0x40] sm:$0xf]
      %v1307 = vld [vmem:[%s5 + $0x44] sm:$0xf]
      %v1308 = vld [vmem:[%s5 + $0x48] sm:$0xf]
      %v1309 = vld [vmem:[%s5 + $0x4c] sm:$0xf]
      %v1310 = vld [vmem:[%s5 + $0x50] sm:$0xf]
      %v1311 = vld [vmem:[%s5 + $0x54] sm:$0xf]
      %v1312 = vld [vmem:[%s5 + $0x58] sm:$0xf]
      %v1313 = vld [vmem:[%s5 + $0x5c] sm:$0xf]
      %v1314 = vld [vmem:[%s5 + $0x60] sm:$0xf]
      %v1315 = vld [vmem:[%s5 + $0x64] sm:$0xf]
      %v1316 = vld [vmem:[%s5 + $0x68] sm:$0xf]
      %v1317 = vld [vmem:[%s5 + $0x6c] sm:$0xf]
      %v1318 = vld [vmem:[%s5 + $0x70] sm:$0xf]
      %v1319 = vld [vmem:[%s5 + $0x74] sm:$0xf]
      %v1320 = vld [vmem:[%s5 + $0x78] sm:$0xf]
      %v1321 = vld [vmem:[%s5 + $0x7c] sm:$0xf]
      %v1322 = vld [vmem:[%s5 + $0x80] sm:$0xf]
      %v1323 = vld [vmem:[%s5 + $0x84] sm:$0xf]
      %v1324 = vld [vmem:[%s5 + $0x88] sm:$0xf]
      %v1325 = vld [vmem:[%s5 + $0x8c] sm:$0xf]
      %v1326 = vld [vmem:[%s5 + $0x90] sm:$0xf]
      %v1327 = vld [vmem:[%s5 + $0x94] sm:$0xf]
      %v1328 = vld [vmem:[%s5 + $0x98] sm:$0xf]
      %v1329 = vld [vmem:[%s5 + $0x9c] sm:$0xf]
      %v1330 = vld [vmem:[%s5 + $0xa0] sm:$0xf]
      %v1331 = vld [vmem:[%s5 + $0xa4] sm:$0xf]
      %v1332 = vld [vmem:[%s5 + $0xa8] sm:$0xf]
      %v1333 = vld [vmem:[%s5 + $0xac] sm:$0xf]
      %v1334 = vld [vmem:[%s5 + $0xb0] sm:$0xf]
      %v1335 = vld [vmem:[%s5 + $0xb4] sm:$0xf]
      %v1336 = vld [vmem:[%s5 + $0xb8] sm:$0xf]
      %v1337 = vld [vmem:[%s5 + $0xbc] sm:$0xf]
      %v1338 = vld [vmem:[%s5 + $0xc0] sm:$0xf]
      %v1339 = vld [vmem:[%s5 + $0xc4] sm:$0xf]
      %v1340 = vld [vmem:[%s5 + $0xc8] sm:$0xf]
      %v1341 = vld [vmem:[%s5 + $0xcc] sm:$0xf]
      %v1342 = vld [vmem:[%s5 + $0xd0] sm:$0xf]
      %v1343 = vld [vmem:[%s5 + $0xd4] sm:$0xf]
      %v1344 = vld [vmem:[%s5 + $0xd8] sm:$0xf]
      %v1345 = vld [vmem:[%s5 + $0xdc] sm:$0xf]
      %v1346 = vld [vmem:[%s5 + $0xe0] sm:$0xf]
      %v1347 = vld [vmem:[%s5 + $0xe4] sm:$0xf]
      %v1348 = vld [vmem:[%s5 + $0xe8] sm:$0xf]
      %v1349 = vld [vmem:[%s5 + $0xec] sm:$0xf]
      %v1350 = vld [vmem:[%s5 + $0xf0] sm:$0xf]
      %v1351 = vld [vmem:[%s5 + $0xf4] sm:$0xf]
      %v1352 = vld [vmem:[%s5 + $0xf8] sm:$0xf]
      %v1353 = vld [vmem:[%s5 + $0xfc] sm:$0xf]
      %v1418 = vunpack.c.l.b16 %v1290
      %v1419 = vunpack.c.l.b16 %v1291
      %v1420 = vunpack.c.l.b16 %v1292
      %v1421 = vunpack.c.l.b16 %v1293
      %v1422 = vunpack.c.l.b16 %v1294
      %v1423 = vunpack.c.l.b16 %v1295
      %v1424 = vunpack.c.l.b16 %v1296
      %v1425 = vunpack.c.l.b16 %v1297
      %v1426 = vunpack.c.l.b16 %v1298
      %v1427 = vunpack.c.l.b16 %v1299
      %v1428 = vunpack.c.l.b16 %v1300
      %v1429 = vunpack.c.l.b16 %v1301
      %v1430 = vunpack.c.l.b16 %v1302
      %v1431 = vunpack.c.l.b16 %v1303
      %v1432 = vunpack.c.l.b16 %v1304
      %v1433 = vunpack.c.l.b16 %v1305
      %v1434 = vunpack.c.l.b16 %v1306
      %v1435 = vunpack.c.l.b16 %v1307
      %v1436 = vunpack.c.l.b16 %v1308
      %v1437 = vunpack.c.l.b16 %v1309
      %v1438 = vunpack.c.l.b16 %v1310
      %v1439 = vunpack.c.l.b16 %v1311
      %v1440 = vunpack.c.l.b16 %v1312
      %v1441 = vunpack.c.l.b16 %v1313
      %v1442 = vunpack.c.l.b16 %v1314
      %v1443 = vunpack.c.l.b16 %v1315
      %v1444 = vunpack.c.l.b16 %v1316
      %v1445 = vunpack.c.l.b16 %v1317
      %v1446 = vunpack.c.l.b16 %v1318
      %v1447 = vunpack.c.l.b16 %v1319
      %v1448 = vunpack.c.l.b16 %v1320
      %v1449 = vunpack.c.l.b16 %v1321
      %v1450 = vunpack.c.l.b16 %v1322
      %v1451 = vunpack.c.l.b16 %v1323
      %v1452 = vunpack.c.l.b16 %v1324
      %v1453 = vunpack.c.l.b16 %v1325
      %v1454 = vunpack.c.l.b16 %v1326
      %v1455 = vunpack.c.l.b16 %v1327
      %v1456 = vunpack.c.l.b16 %v1328
      %v1457 = vunpack.c.l.b16 %v1329
      %v1458 = vunpack.c.l.b16 %v1330
      %v1459 = vunpack.c.l.b16 %v1331
      %v1460 = vunpack.c.l.b16 %v1332
      %v1461 = vunpack.c.l.b16 %v1333
      %v1462 = vunpack.c.l.b16 %v1334
      %v1463 = vunpack.c.l.b16 %v1335
      %v1464 = vunpack.c.l.b16 %v1336
      %v1465 = vunpack.c.l.b16 %v1337
      %v1466 = vunpack.c.l.b16 %v1338
      %v1467 = vunpack.c.l.b16 %v1339
      %v1468 = vunpack.c.l.b16 %v1340
      %v1469 = vunpack.c.l.b16 %v1341
      %v1470 = vunpack.c.l.b16 %v1342
      %v1471 = vunpack.c.l.b16 %v1343
      %v1472 = vunpack.c.l.b16 %v1344
      %v1473 = vunpack.c.l.b16 %v1345
      %v1474 = vunpack.c.l.b16 %v1346
      %v1475 = vunpack.c.l.b16 %v1347
      %v1476 = vunpack.c.l.b16 %v1348
      %v1477 = vunpack.c.l.b16 %v1349
      %v1478 = vunpack.c.l.b16 %v1350
      %v1479 = vunpack.c.l.b16 %v1351
      %v1480 = vunpack.c.l.b16 %v1352
      %v1481 = vunpack.c.l.b16 %v1353
      %v1482 = vpack.c.b16 %v1419, %v1418
      %v1483 = vpack.c.b16 %v1421, %v1420
      %v1484 = vpack.c.b16 %v1423, %v1422
      %v1485 = vpack.c.b16 %v1425, %v1424
      %v1486 = vpack.c.b16 %v1427, %v1426
      %v1487 = vpack.c.b16 %v1429, %v1428
      %v1488 = vpack.c.b16 %v1431, %v1430
      %v1489 = vpack.c.b16 %v1433, %v1432
      %v1490 = vpack.c.b16 %v1435, %v1434
      %v1491 = vpack.c.b16 %v1437, %v1436
      %v1492 = vpack.c.b16 %v1439, %v1438
      %v1493 = vpack.c.b16 %v1441, %v1440
      %v1494 = vpack.c.b16 %v1443, %v1442
      %v1495 = vpack.c.b16 %v1445, %v1444
      %v1496 = vpack.c.b16 %v1447, %v1446
      %v1497 = vpack.c.b16 %v1449, %v1448
      %v1498 = vpack.c.b16 %v1451, %v1450
      %v1499 = vpack.c.b16 %v1453, %v1452
      %v1500 = vpack.c.b16 %v1455, %v1454
      %v1501 = vpack.c.b16 %v1457, %v1456
      %v1502 = vpack.c.b16 %v1459, %v1458
      %v1503 = vpack.c.b16 %v1461, %v1460
      %v1504 = vpack.c.b16 %v1463, %v1462
      %v1505 = vpack.c.b16 %v1465, %v1464
      %v1506 = vpack.c.b16 %v1467, %v1466
      %v1507 = vpack.c.b16 %v1469, %v1468
      %v1508 = vpack.c.b16 %v1471, %v1470
      %v1509 = vpack.c.b16 %v1473, %v1472
      %v1510 = vpack.c.b16 %v1475, %v1474
      %v1511 = vpack.c.b16 %v1477, %v1476
      %v1512 = vpack.c.b16 %v1479, %v1478
      %v1513 = vpack.c.b16 %v1481, %v1480
      %1546 = vmatprep.subr.bf16.mxu0 0
      %1547 = vmatpush1.bf16.msra.mxu0 %v1489
      %1548 = vmatprep.subr.bf16.mxu0 0
      %1549 = vmatpush1.bf16.msra.mxu0 %v1488
      %1550 = vmatprep.subr.bf16.mxu0 0
      %1551 = vmatpush1.bf16.msra.mxu0 %v1487
      %1552 = vmatprep.subr.bf16.mxu0 0
      %1553 = vmatpush1.bf16.msra.mxu0 %v1486
      %1554 = vmatprep.subr.bf16.mxu0 0
      %1555 = vmatpush1.bf16.msra.mxu0 %v1485
      %1556 = vmatprep.subr.bf16.mxu0 0
      %1557 = vmatpush1.bf16.msra.mxu0 %v1484
      %1558 = vmatprep.subr.bf16.mxu0 0
      %1559 = vmatpush1.bf16.msra.mxu0 %v1483
      %1560 = vmatprep.subr.bf16.mxu0 0
      %1561 = vmatpush1.bf16.msra.mxu0 %v1482
      %1562 = vmatprep.subr.bf16.mxu0 0
      %1563 = vmatpush2.bf16.msra.mxu0 %v1497
      %1564 = vmatprep.subr.bf16.mxu0 0
      %1565 = vmatpush2.bf16.msra.mxu0 %v1496
      %1566 = vmatprep.subr.bf16.mxu0 0
      %1567 = vmatpush2.bf16.msra.mxu0 %v1495
      %1568 = vmatprep.subr.bf16.mxu0 0
      %1569 = vmatpush2.bf16.msra.mxu0 %v1494
      %1570 = vmatprep.subr.bf16.mxu0 0
      %1571 = vmatpush2.bf16.msra.mxu0 %v1493
      %1572 = vmatprep.subr.bf16.mxu0 0
      %1573 = vmatpush2.bf16.msra.mxu0 %v1492
      %1574 = vmatprep.subr.bf16.mxu0 0
      %1575 = vmatpush2.bf16.msra.mxu0 %v1491
      %1576 = vmatprep.subr.bf16.mxu0 0
      %1577 = vmatpush2.bf16.msra.mxu0 %v1490
      %1578 = vmatprep.mubr.bf16.mxu0 %v400
      %1579 = vmatmul.mubr.bf16.gmra.mxu0 %v399
      %v1580 = vpop.f32.mrf.mxu0
      %v1581 = vadd.f32 0.0, %v1580
      %v1582 = vpop.f32.mrf.mxu0
      %v1583 = vpop.f32.mrf.mxu0
      %v1584 = vadd.f32 0.0, %v1583
      %v1585 = vpop.f32.mrf.mxu0
      %1586 = vmatprep.mubr.bf16.mxu0 %v404
      %1587 = vmatmul.mubr.bf16.gmra.mxu0 %v403
      %v1588 = vpop.f32.mrf.mxu0
      %v1589 = vadd.f32 0.0, %v1588
      %v1590 = vpop.f32.mrf.mxu0
      %v1591 = vpop.f32.mrf.mxu0
      %v1592 = vadd.f32 0.0, %v1591
      %v1593 = vpop.f32.mrf.mxu0
      %1594 = vmatprep.mubr.bf16.mxu0 %v408
      %1595 = vmatmul.mubr.bf16.gmra.mxu0 %v407
      %v1596 = vpop.f32.mrf.mxu0
      %v1597 = vadd.f32 0.0, %v1596
      %v1598 = vpop.f32.mrf.mxu0
      %v1599 = vpop.f32.mrf.mxu0
      %v1600 = vadd.f32 0.0, %v1599
      %v1601 = vpop.f32.mrf.mxu0
      %1602 = vmatprep.mubr.bf16.mxu0 %v412
      %1603 = vmatmul.mubr.bf16.gmra.mxu0 %v411
      %v1604 = vpop.f32.mrf.mxu0
      %v1605 = vadd.f32 0.0, %v1604
      %v1606 = vpop.f32.mrf.mxu0
      %v1607 = vpop.f32.mrf.mxu0
      %v1608 = vadd.f32 0.0, %v1607
      %v1609 = vpop.f32.mrf.mxu0
      %1610 = vdwg.mxu0
      %1611 = vmatprep.subr.bf16.mxu0 0
      %1612 = vmatpush1.bf16.msra.mxu0 %v1505
      %1613 = vmatprep.subr.bf16.mxu0 0
      %1614 = vmatpush1.bf16.msra.mxu0 %v1504
      %1615 = vmatprep.subr.bf16.mxu0 0
      %1616 = vmatpush1.bf16.msra.mxu0 %v1503
      %1617 = vmatprep.subr.bf16.mxu0 0
      %1618 = vmatpush1.bf16.msra.mxu0 %v1502
      %1619 = vmatprep.subr.bf16.mxu0 0
      %1620 = vmatpush1.bf16.msra.mxu0 %v1501
      %1621 = vmatprep.subr.bf16.mxu0 0
      %1622 = vmatpush1.bf16.msra.mxu0 %v1500
      %1623 = vmatprep.subr.bf16.mxu0 0
      %1624 = vmatpush1.bf16.msra.mxu0 %v1499
      %1625 = vmatprep.subr.bf16.mxu0 0
      %1626 = vmatpush1.bf16.msra.mxu0 %v1498
      %1627 = vmatprep.subr.bf16.mxu0 0
      %1628 = vmatpush2.bf16.msra.mxu0 %v1513
      %1629 = vmatprep.subr.bf16.mxu0 0
      %1630 = vmatpush2.bf16.msra.mxu0 %v1512
      %1631 = vmatprep.subr.bf16.mxu0 0
      %1632 = vmatpush2.bf16.msra.mxu0 %v1511
      %1633 = vmatprep.subr.bf16.mxu0 0
      %1634 = vmatpush2.bf16.msra.mxu0 %v1510
      %1635 = vmatprep.subr.bf16.mxu0 0
      %1636 = vmatpush2.bf16.msra.mxu0 %v1509
      %1637 = vmatprep.subr.bf16.mxu0 0
      %1638 = vmatpush2.bf16.msra.mxu0 %v1508
      %1639 = vmatprep.subr.bf16.mxu0 0
      %1640 = vmatpush2.bf16.msra.mxu0 %v1507
      %1641 = vmatprep.subr.bf16.mxu0 0
      %1642 = vmatpush2.bf16.msra.mxu0 %v1506
      %1643 = vmatprep.mubr.bf16.mxu0 %v402
      %1644 = vmatmul.mubr.bf16.gmra.mxu0 %v401
      %v1645 = vpop.f32.mrf.mxu0
      %v1646 = vadd.f32 %v1581, %v1645
      %v1647 = vpop.f32.mrf.mxu0
      %v1648 = vpop.f32.mrf.mxu0
      %v1649 = vadd.f32 %v1584, %v1648
      %v1650 = vpop.f32.mrf.mxu0
      %1651 = vmatprep.mubr.bf16.mxu0 %v406
      %1652 = vmatmul.mubr.bf16.gmra.mxu0 %v405
      %v1653 = vpop.f32.mrf.mxu0
      %v1654 = vadd.f32 %v1589, %v1653
      %v1655 = vpop.f32.mrf.mxu0
      %v1656 = vpop.f32.mrf.mxu0
      %v1657 = vadd.f32 %v1592, %v1656
      %v1658 = vpop.f32.mrf.mxu0
      %1659 = vmatprep.mubr.bf16.mxu0 %v410
      %1660 = vmatmul.mubr.bf16.gmra.mxu0 %v409
      %v1661 = vpop.f32.mrf.mxu0
      %v1662 = vadd.f32 %v1597, %v1661
      %v1663 = vpop.f32.mrf.mxu0
      %v1664 = vpop.f32.mrf.mxu0
      %v1665 = vadd.f32 %v1600, %v1664
      %v1666 = vpop.f32.mrf.mxu0
      %1667 = vmatprep.mubr.bf16.mxu0 %v414
      %1668 = vmatmul.mubr.bf16.gmra.mxu0 %v413
      %v1669 = vpop.f32.mrf.mxu0
      %v1670 = vadd.f32 %v1605, %v1669
      %v1671 = vpop.f32.mrf.mxu0
      %v1672 = vpop.f32.mrf.mxu0
      %v1673 = vadd.f32 %v1608, %v1672
      %v1674 = vpop.f32.mrf.mxu0
      %1675 = vdwg.mxu0
      %v1676 = vadd.f32 %v1282, %v1646
      %v1677 = vadd.f32 %v1283, %v1649
      %v1678 = vadd.f32 %v1284, %v1654
      %v1679 = vadd.f32 %v1285, %v1657
      %v1680 = vadd.f32 %v1286, %v1662
      %v1681 = vadd.f32 %v1287, %v1665
      %v1682 = vadd.f32 %v1288, %v1670
      %v1683 = vadd.f32 %v1289, %v1673
      %v1684 = vpack.c.bf16 %v1677, %v1676
      %v1685 = vpack.c.bf16 %v1679, %v1678
      %v1686 = vpack.c.bf16 %v1681, %v1680
      %v1687 = vpack.c.bf16 %v1683, %v1682
      %v1692 = vunpack.c.l.b16 %v1684
      %v1693 = vunpack.c.h.b16 %v1684
      %v1694 = vunpack.c.l.b16 %v1685
      %v1695 = vunpack.c.h.b16 %v1685
      %v1696 = vunpack.c.l.b16 %v1686
      %v1697 = vunpack.c.h.b16 %v1686
      %v1698 = vunpack.c.l.b16 %v1687
      %v1699 = vunpack.c.h.b16 %v1687
      %v1700 = vpack.c.b16 %v1692, %v1692
      %v1701 = vpack.c.b16 %v1693, %v1693
      %v1702 = vpack.c.b16 %v1694, %v1694
      %v1703 = vpack.c.b16 %v1695, %v1695
      %v1704 = vpack.c.b16 %v1696, %v1696
      %v1705 = vpack.c.b16 %v1697, %v1697
      %v1706 = vpack.c.b16 %v1698, %v1698
      %v1707 = vpack.c.b16 %v1699, %v1699
      %1716 = vst [vmem:[%s256] sm:$0xf] %v1700
      %1717 = vst [vmem:[%s256 + $0x4] sm:$0xf] %v1701
      %1718 = vst [vmem:[%s256 + $0x8] sm:$0xf] %v1702
      %1719 = vst [vmem:[%s256 + $0xc] sm:$0xf] %v1703
      %1720 = vst [vmem:[%s256 + $0x10] sm:$0xf] %v1704
      %1721 = vst [vmem:[%s256 + $0x14] sm:$0xf] %v1705
      %1722 = vst [vmem:[%s256 + $0x18] sm:$0xf] %v1706
      %1723 = vst [vmem:[%s256 + $0x1c] sm:$0xf] %v1707
      %s1724 = smul.u32 8, %s17
      %p1725 = scmp.lt.s32.totalorder %s1724, 15
      %s1726 = scalar_select %p1725, %s1724, 15
      %s1727 = smul.addr %s1726, 4
      %s1728 = scalar_lea.vmem %s6, %s1727
      // Predicated region
      $region45: #{_lambda_.2} parent=43 // pred_check
        %p1729 = pneg %p166
      $region46: #{_lambda_.2} parent=43 // pred_check_branch
        %1731 = sbr.rel (%p1729) target = $region48
      $region47: #{_lambda_.2} parent=43 // pred_region
        %s1732 = smul.u32 8, %s17
      $region48: #{_lambda_.2} parent=43 // pred_fallthru
        _
    $region44: #{_lambda_.2} parent=5 // pred_fallthru
      _
    %p1733 = scmp.le.s32.totalorder 2, %s12
    // Predicated region
    $region49: #{_lambda_.2} parent=5 // pred_check
      %p1734 = pneg %p1733
    $region50: #{_lambda_.2} parent=5 // pred_check_branch
      %1736 = sbr.rel (%p1734) target = $region52
    $region51: #{_lambda_.2} parent=5 // pred_region
      %s1737 = ssub.s32 %s12, 2
      // Predicated region
      $region53: #{_lambda_.2} parent=51 // pred_check
        %p1738 = pneg %p172
      $region54: #{_lambda_.2} parent=51 // pred_check_branch
        %1740 = sbr.rel (%p1738) target = $region56
      $region55: #{_lambda_.2} parent=51 // pred_region
        %s1741 = smul.u32 8, %s18
        %p1742 = scmp.lt.s32.totalorder %s1741, 15
        %s1743 = scalar_select %p1742, %s1741, 15
        %s1744 = smul.addr %s1743, 4
        %s1745 = scalar_lea.vmem %s6, %s1744
      $region56: #{_lambda_.2} parent=51 // pred_fallthru
        _
    $region52: #{_lambda_.2} parent=5 // pred_fallthru
      _
  $region6: #{_lambda_.2} parent=0 // loop_footer
    %s16 = sadd.s32 1, %s12
  $region7: #{_lambda_.2} parent=0 // loop_footer_branch
    %11 = sbr.rel target = $region3
  $region8: #{_lambda_.2} parent=0 // loop_exit
    _

</llo_original>
